<compile_context>
chip_gen: v6e
topology: v6e:2x2x1
jax: 0.10.0
libtpu: 0.0.40
codegen_flags: <defaults>
</compile_context>

<pallas_src>
import functools

import jax
import jax.numpy as jnp
from jax import lax
from jax.experimental import pallas as pl
from jax.experimental.pallas import tpu as pltpu

LANES = 128  # padded lane width for bias slab / classifier output


def decoder_kernel(ids_ref, emb_ref, h0_ref, wih_ref, whh_ref, bias_ref,
                   wout_ref, logp_ref, hlast_ref):
    # ids_ref:  (S*B, 1) int32  time-major token ids (row t*B+b)
    # emb_ref:  (V, H)   f32    embedding table
    # h0_ref:   (B, H)   f32
    # wih_ref:  (H, 3H)  f32    weight_ih.T, gate order [r|z|n]
    # whh_ref:  (H, 3H)  f32    weight_hh.T, gate order [r|z|n]
    # bias_ref: (2, 128) f32    row0=[b_ir+b_hr | b_iz+b_hz | b_in | b_hn] pad0
    #                           row1=[b_out | -1e30 ...] (padded lanes killed
    #                           in the log-sum-exp)
    # wout_ref: (H, 128) f32    out.weight.T zero-padded to 128 lanes
    # logp_ref: (B, 128) f32    lane-dense log-probs (wrapper slices [:, :O])
    # hlast_ref:(B, H)   f32    final hidden state
    SB = ids_ref.shape[0]
    V, H = emb_ref.shape
    B = h0_ref.shape[0]
    S = SB // B
    H2 = 2 * H

    # ---- fused embedding gather: one-hot @ table on the MXU (exact f32) -----
    ids = ids_ref[...]                                          # (SB, 1) int32
    vocab_iota = lax.broadcasted_iota(jnp.int32, (SB, V), 1)    # lanes = vocab
    onehot = (vocab_iota == ids).astype(jnp.float32)            # (SB, V)
    x_all = jnp.dot(onehot, emb_ref[...],
                    preferred_element_type=jnp.float32)         # (SB, H)
    x_all = jnp.maximum(x_all, 0.0)                             # F.relu pre-GRU

    # ---- hoisted bias / weight prep (off the serial critical path) ----------
    bias = bias_ref[...]
    b_gi = bias[0:1, 0:3 * H]                                   # (1, 3H)
    b_hn = jnp.broadcast_to(bias[0:1, 3 * H:4 * H], (B, H))     # (B, H)
    b_out = bias[1:2, :]                                        # (1, 128)

    whh = whh_ref[...]
    whh_rz = whh[:, 0:H2]                                       # (H, 2H)
    whh_n = whh[:, H2:3 * H]                                    # (H, H)

    # ---- hoisted input projection: ONE MXU pass over all timesteps ----------
    gi_all = jnp.dot(x_all, wih_ref[...],
                     preferred_element_type=jnp.float32) + b_gi  # (SB, 3H)
    gi_rz_all = gi_all[:, 0:H2]                                  # (SB, 2H)
    gi_n_all = gi_all[:, H2:3 * H]                               # (SB, H)
    # Note: live gi slabs + weights stay well under the 64-vreg ceiling at
    # these sizes; no VMEM scratch staging needed.

    def gru_cell(t, h_prev):
        lo = t * B                                               # static, 8-aligned
        # merged r/z: one dot + ONE sigmoid over (B, 2H), then lane split
        gh_rz = jnp.dot(h_prev, whh_rz, preferred_element_type=jnp.float32)
        gh_n = jnp.dot(h_prev, whh_n, preferred_element_type=jnp.float32)
        rz = jax.nn.sigmoid(gi_rz_all[lo:lo + B, :] + gh_rz)     # (B, 2H)
        r = rz[:, 0:H]
        z = rz[:, H:H2]
        n = jnp.tanh(gi_n_all[lo:lo + B, :] + r * (gh_n + b_hn))
        return (1.0 - z) * n + z * h_prev

    # fully unrolled recurrence (S static and small) -> scheduler sees all
    # steps and can overlap step t+1's MXU push with step t's gate math.
    h = h0_ref[...]
    h1 = None
    for t in range(S):
        h = gru_cell(t, h)
        if t == 0:
            h1 = h                                               # output[0] -> classifier
    hlast_ref[...] = h

    # ---- classifier: LogSoftmax(Linear(output[0])), lane-dense (B,128) ------
    # h1 is ready after step 0; single basic block, so the LLO scheduler can
    # hide this dot + EUP work under recurrence steps 1..S-1.
    logits = jnp.dot(h1, wout_ref[...],
                     preferred_element_type=jnp.float32) + b_out  # (B, 128)
    m = jnp.max(logits, axis=-1, keepdims=True)
    shifted = logits - m
    lse = jnp.log(jnp.sum(jnp.exp(shifted), axis=-1, keepdims=True))
    logp_ref[...] = shifted - lse


def prepare_params(params):
    """One-time preprocessing: transpose, bias folding/packing, lane padding."""
    H = params["embedding"].shape[1]
    O = params["w_out"].shape[0]
    assert 4 * H <= LANES and O <= LANES, "toy-size packing assumes 4H,O <= 128"

    w_ih, w_hh = params["w_ih"], params["w_hh"]           # (3H, H) PyTorch layout
    b_ih, b_hh = params["b_ih"], params["b_hh"]           # (3H,)
    b_gi = jnp.concatenate([
        b_ih[0 * H:1 * H] + b_hh[0 * H:1 * H],            # r: fold both biases
        b_ih[1 * H:2 * H] + b_hh[1 * H:2 * H],            # z: fold both biases
        b_ih[2 * H:3 * H],                                # n: b_in only
    ])
    b_hn = b_hh[2 * H:3 * H]                              # stays inside r*(...)

    row0 = jnp.concatenate([b_gi, b_hn]).astype(jnp.float32)        # (4H,)
    row0 = jnp.pad(row0, (0, LANES - row0.shape[0]))
    row1 = jnp.concatenate([
        params["b_out"].astype(jnp.float32),
        jnp.full((LANES - O,), -1e30, jnp.float32),       # padded lanes vanish
    ])
    bias_slab = jnp.stack([row0, row1])                   # (2, 128)

    w_out_pad = jnp.zeros((H, LANES), jnp.float32).at[:, :O].set(
        jnp.asarray(params["w_out"].T, jnp.float32))      # (H, 128)

    return {
        "embedding": params["embedding"].astype(jnp.float32),       # (V, H)
        "w_ih_t": jnp.asarray(w_ih.T, jnp.float32),                 # (H, 3H)
        "w_hh_t": jnp.asarray(w_hh.T, jnp.float32),                 # (H, 3H)
        "bias": bias_slab,                                          # (2, 128)
        "w_out_pad": w_out_pad,                                     # (H, 128)
    }


@functools.partial(jax.jit, static_argnames=("output_size",))
def decoder_forward(prep, input_ids, hidden, *, output_size):
    """input_ids (B, S) int32, hidden (1, B, H) f32 -> (logp (B, O), hidden)."""
    B, S = input_ids.shape
    H = prep["embedding"].shape[1]

    # time-major token ids (row t*B+b); the embedding gather itself happens
    # inside the kernel (one-hot matmul), so no XLA gather / x materialization.
    tok = jnp.transpose(input_ids, (1, 0)).reshape(S * B, 1).astype(jnp.int32)
    h0 = hidden[0].astype(jnp.float32)

    vmem = pl.BlockSpec(memory_space=pltpu.MemorySpace.VMEM)
    logp_pad, h_last = pl.pallas_call(
        decoder_kernel,
        out_shape=(jax.ShapeDtypeStruct((B, LANES), jnp.float32),
                   jax.ShapeDtypeStruct((B, H), jnp.float32)),
        in_specs=[vmem] * 7,
        out_specs=(vmem, vmem),
    )(tok, prep["embedding"], h0, prep["w_ih_t"], prep["w_hh_t"],
      prep["bias"], prep["w_out_pad"])
    return logp_pad[:, :output_size], h_last[None]


def decoder_reference(params, input_ids, hidden):
    """Pure-JAX reference mirroring the PyTorch forward (original param layout)."""
    H = params["embedding"].shape[1]
    emb = jnp.take(params["embedding"], input_ids, axis=0)
    x = jnp.transpose(emb, (1, 0, 2)).astype(jnp.float32)

    def cell(h, x_t):
        x_t = jnp.maximum(x_t, 0.0)
        gi = x_t @ params["w_ih"].T + params["b_ih"]
        gh = h @ params["w_hh"].T + params["b_hh"]
        r = jax.nn.sigmoid(gi[:, :H] + gh[:, :H])
        z = jax.nn.sigmoid(gi[:, H:2 * H] + gh[:, H:2 * H])
        n = jnp.tanh(gi[:, 2 * H:] + r * gh[:, 2 * H:])
        h_new = (1.0 - z) * n + z * h
        return h_new, h_new

    h_last, ys = lax.scan(cell, hidden[0].astype(jnp.float32), x)
    logits = ys[0] @ params["w_out"].T + params["b_out"]
    return jax.nn.log_softmax(logits, axis=-1), h_last[None]


def init_params(key, hidden_size, output_size):
    ks = jax.random.split(key, 7)
    k_gru = 1.0 / jnp.sqrt(hidden_size)
    k_lin = 1.0 / jnp.sqrt(hidden_size)
    u = lambda k, shape, s: jax.random.uniform(k, shape, jnp.float32, -s, s)
    return {
        "embedding": jax.random.normal(ks[0], (output_size, hidden_size), jnp.float32),
        "w_ih": u(ks[1], (3 * hidden_size, hidden_size), k_gru),
        "w_hh": u(ks[2], (3 * hidden_size, hidden_size), k_gru),
        "b_ih": u(ks[3], (3 * hidden_size,), k_gru),
        "b_hh": u(ks[4], (3 * hidden_size,), k_gru),
        "w_out": u(ks[5], (output_size, hidden_size), k_lin),
        "b_out": u(ks[6], (output_size,), k_lin),
    }


if __name__ == "__main__":
    B, S = 8, 8          # batch (sublane-filling), sequence length
    hidden_size = 32
    output_size = 16     # vocab / class count

    key = jax.random.PRNGKey(0)
    k_params, k_ids, k_h = jax.random.split(key, 3)

    params = init_params(k_params, hidden_size, output_size)
    prepared = prepare_params(params)   # one-time transpose / pack / bias-fold
    input_ids = jax.random.randint(k_ids, (B, S), 0, output_size, jnp.int32)
    hidden = jax.random.normal(k_h, (1, B, hidden_size), jnp.float32) * 0.1

    logp, h_out = decoder_forward(prepared, input_ids, hidden,
                                  output_size=output_size)
    logp = jax.block_until_ready(logp)
    h_out = jax.block_until_ready(h_out)

    logp_ref, h_ref = decoder_reference(params, input_ids, hidden)
    assert logp.shape == (B, output_size) and h_out.shape == (1, B, hidden_size)
    assert jnp.allclose(logp, logp_ref, atol=1e-4, rtol=1e-4)
    assert jnp.allclose(h_out, h_ref, atol=1e-4, rtol=1e-4)

    print("KERNEL_OK")
</pallas_src>

<mosaic_0001>
module attributes {stable_mosaic.version = 11 : i64} {
  func.func @decoder_kernel(%arg0: memref<64x1xi32, #tpu.memory_space<vmem>>, %arg1: memref<16x32xf32, #tpu.memory_space<vmem>>, %arg2: memref<8x32xf32, #tpu.memory_space<vmem>>, %arg3: memref<32x96xf32, #tpu.memory_space<vmem>>, %arg4: memref<32x96xf32, #tpu.memory_space<vmem>>, %arg5: memref<2x128xf32, #tpu.memory_space<vmem>>, %arg6: memref<32x128xf32, #tpu.memory_space<vmem>>, %arg7: memref<8x128xf32, #tpu.memory_space<vmem>>, %arg8: memref<8x32xf32, #tpu.memory_space<vmem>>) attributes {dimension_semantics = [], scalar_prefetch = 0 : i64, scratch_operands = 0 : i64, tpu.core_type = #tpu.core_type<tc>} {
    %c0 = arith.constant 0 : index
    %c0_0 = arith.constant 0 : index
    %0 = vector.load %arg0[%c0, %c0_0] : memref<64x1xi32, #tpu.memory_space<vmem>>, vector<64x1xi32>
    %1 = tpu.iota {dimensions = array<i32: 1>} : vector<64x16xi32>
    %2 = vector.broadcast %0 : vector<64x1xi32> to vector<64x16xi32>
    %3 = arith.cmpi eq, %1, %2 : vector<64x16xi32>
    %4 = arith.extui %3 : vector<64x16xi1> to vector<64x16xi32>
    %5 = arith.sitofp %4 : vector<64x16xi32> to vector<64x16xf32>
    %c0_1 = arith.constant 0 : index
    %c0_2 = arith.constant 0 : index
    %6 = vector.load %arg1[%c0_1, %c0_2] : memref<16x32xf32, #tpu.memory_space<vmem>>, vector<16x32xf32>
    %cst = arith.constant dense<0.000000e+00> : vector<64x32xf32>
    %7 = tpu.matmul %5, %6, %cst {dimension_numbers = #tpu.dot_dimension_numbers<[1], [0], [0], [1], [0, 0, 1, 1], [], []>} : vector<64x16xf32>, vector<16x32xf32>, vector<64x32xf32> -> vector<64x32xf32>
    %cst_3 = arith.constant 0.000000e+00 : f32
    %8 = vector.broadcast %cst_3 : f32 to vector<64x32xf32>
    %9 = arith.maximumf %7, %8 : vector<64x32xf32>
    %c0_4 = arith.constant 0 : index
    %c0_5 = arith.constant 0 : index
    %10 = vector.load %arg5[%c0_4, %c0_5] : memref<2x128xf32, #tpu.memory_space<vmem>>, vector<2x128xf32>
    %11 = vector.extract_strided_slice %10 {offsets = [0, 0], sizes = [1, 96], strides = [1, 1]} : vector<2x128xf32> to vector<1x96xf32>
    %12 = vector.extract_strided_slice %10 {offsets = [0, 96], sizes = [1, 32], strides = [1, 1]} : vector<2x128xf32> to vector<1x32xf32>
    %13 = vector.shape_cast %12 : vector<1x32xf32> to vector<1x32xf32>
    %14 = vector.broadcast %13 : vector<1x32xf32> to vector<8x32xf32>
    %15 = vector.extract_strided_slice %10 {offsets = [1, 0], sizes = [1, 128], strides = [1, 1]} : vector<2x128xf32> to vector<1x128xf32>
    %c0_6 = arith.constant 0 : index
    %c0_7 = arith.constant 0 : index
    %16 = vector.load %arg4[%c0_6, %c0_7] : memref<32x96xf32, #tpu.memory_space<vmem>>, vector<32x96xf32>
    %17 = vector.extract_strided_slice %16 {offsets = [0, 0], sizes = [32, 64], strides = [1, 1]} : vector<32x96xf32> to vector<32x64xf32>
    %18 = vector.extract_strided_slice %16 {offsets = [0, 64], sizes = [32, 32], strides = [1, 1]} : vector<32x96xf32> to vector<32x32xf32>
    %c0_8 = arith.constant 0 : index
    %c0_9 = arith.constant 0 : index
    %19 = vector.load %arg3[%c0_8, %c0_9] : memref<32x96xf32, #tpu.memory_space<vmem>>, vector<32x96xf32>
    %cst_10 = arith.constant dense<0.000000e+00> : vector<64x96xf32>
    %20 = tpu.matmul %9, %19, %cst_10 {dimension_numbers = #tpu.dot_dimension_numbers<[1], [0], [0], [1], [0, 0, 1, 1], [], []>} : vector<64x32xf32>, vector<32x96xf32>, vector<64x96xf32> -> vector<64x96xf32>
    %21 = vector.broadcast %11 : vector<1x96xf32> to vector<64x96xf32>
    %22 = arith.addf %20, %21 : vector<64x96xf32>
    %23 = vector.extract_strided_slice %22 {offsets = [0, 0], sizes = [64, 64], strides = [1, 1]} : vector<64x96xf32> to vector<64x64xf32>
    %24 = vector.extract_strided_slice %22 {offsets = [0, 64], sizes = [64, 32], strides = [1, 1]} : vector<64x96xf32> to vector<64x32xf32>
    %c0_11 = arith.constant 0 : index
    %c0_12 = arith.constant 0 : index
    %25 = vector.load %arg2[%c0_11, %c0_12] : memref<8x32xf32, #tpu.memory_space<vmem>>, vector<8x32xf32>
    %cst_13 = arith.constant dense<0.000000e+00> : vector<8x64xf32>
    %26 = tpu.matmul %25, %17, %cst_13 {dimension_numbers = #tpu.dot_dimension_numbers<[1], [0], [0], [1], [0, 0, 1, 1], [], []>} : vector<8x32xf32>, vector<32x64xf32>, vector<8x64xf32> -> vector<8x64xf32>
    %cst_14 = arith.constant dense<0.000000e+00> : vector<8x32xf32>
    %27 = tpu.matmul %25, %18, %cst_14 {dimension_numbers = #tpu.dot_dimension_numbers<[1], [0], [0], [1], [0, 0, 1, 1], [], []>} : vector<8x32xf32>, vector<32x32xf32>, vector<8x32xf32> -> vector<8x32xf32>
    %28 = vector.extract_strided_slice %23 {offsets = [0, 0], sizes = [8, 64], strides = [1, 1]} : vector<64x64xf32> to vector<8x64xf32>
    %29 = arith.addf %28, %26 : vector<8x64xf32>
    %30 = arith.negf %29 : vector<8x64xf32>
    %31 = math.exp %30 : vector<8x64xf32>
    %cst_15 = arith.constant 1.000000e+00 : f32
    %32 = vector.broadcast %cst_15 : f32 to vector<8x64xf32>
    %33 = arith.addf %32, %31 : vector<8x64xf32>
    %34 = arith.divf %32, %33 : vector<8x64xf32>
    %35 = vector.extract_strided_slice %34 {offsets = [0, 0], sizes = [8, 32], strides = [1, 1]} : vector<8x64xf32> to vector<8x32xf32>
    %36 = vector.extract_strided_slice %34 {offsets = [0, 32], sizes = [8, 32], strides = [1, 1]} : vector<8x64xf32> to vector<8x32xf32>
    %37 = vector.extract_strided_slice %24 {offsets = [0, 0], sizes = [8, 32], strides = [1, 1]} : vector<64x32xf32> to vector<8x32xf32>
    %38 = arith.addf %27, %14 : vector<8x32xf32>
    %39 = arith.mulf %35, %38 : vector<8x32xf32>
    %40 = arith.addf %37, %39 : vector<8x32xf32>
    %41 = math.tanh %40 : vector<8x32xf32>
    %cst_16 = arith.constant 1.000000e+00 : f32
    %42 = vector.broadcast %cst_16 : f32 to vector<8x32xf32>
    %43 = arith.subf %42, %36 : vector<8x32xf32>
    %44 = arith.mulf %43, %41 : vector<8x32xf32>
    %45 = arith.mulf %36, %25 : vector<8x32xf32>
    %46 = arith.addf %44, %45 : vector<8x32xf32>
    %cst_17 = arith.constant dense<0.000000e+00> : vector<8x64xf32>
    %47 = tpu.matmul %46, %17, %cst_17 {dimension_numbers = #tpu.dot_dimension_numbers<[1], [0], [0], [1], [0, 0, 1, 1], [], []>} : vector<8x32xf32>, vector<32x64xf32>, vector<8x64xf32> -> vector<8x64xf32>
    %cst_18 = arith.constant dense<0.000000e+00> : vector<8x32xf32>
    %48 = tpu.matmul %46, %18, %cst_18 {dimension_numbers = #tpu.dot_dimension_numbers<[1], [0], [0], [1], [0, 0, 1, 1], [], []>} : vector<8x32xf32>, vector<32x32xf32>, vector<8x32xf32> -> vector<8x32xf32>
    %49 = vector.extract_strided_slice %23 {offsets = [8, 0], sizes = [8, 64], strides = [1, 1]} : vector<64x64xf32> to vector<8x64xf32>
    %50 = arith.addf %49, %47 : vector<8x64xf32>
    %51 = arith.negf %50 : vector<8x64xf32>
    %52 = math.exp %51 : vector<8x64xf32>
    %cst_19 = arith.constant 1.000000e+00 : f32
    %53 = vector.broadcast %cst_19 : f32 to vector<8x64xf32>
    %54 = arith.addf %53, %52 : vector<8x64xf32>
    %55 = arith.divf %53, %54 : vector<8x64xf32>
    %56 = vector.extract_strided_slice %55 {offsets = [0, 0], sizes = [8, 32], strides = [1, 1]} : vector<8x64xf32> to vector<8x32xf32>
    %57 = vector.extract_strided_slice %55 {offsets = [0, 32], sizes = [8, 32], strides = [1, 1]} : vector<8x64xf32> to vector<8x32xf32>
    %58 = vector.extract_strided_slice %24 {offsets = [8, 0], sizes = [8, 32], strides = [1, 1]} : vector<64x32xf32> to vector<8x32xf32>
    %59 = arith.addf %48, %14 : vector<8x32xf32>
    %60 = arith.mulf %56, %59 : vector<8x32xf32>
    %61 = arith.addf %58, %60 : vector<8x32xf32>
    %62 = math.tanh %61 : vector<8x32xf32>
    %cst_20 = arith.constant 1.000000e+00 : f32
    %63 = vector.broadcast %cst_20 : f32 to vector<8x32xf32>
    %64 = arith.subf %63, %57 : vector<8x32xf32>
    %65 = arith.mulf %64, %62 : vector<8x32xf32>
    %66 = arith.mulf %57, %46 : vector<8x32xf32>
    %67 = arith.addf %65, %66 : vector<8x32xf32>
    %cst_21 = arith.constant dense<0.000000e+00> : vector<8x64xf32>
    %68 = tpu.matmul %67, %17, %cst_21 {dimension_numbers = #tpu.dot_dimension_numbers<[1], [0], [0], [1], [0, 0, 1, 1], [], []>} : vector<8x32xf32>, vector<32x64xf32>, vector<8x64xf32> -> vector<8x64xf32>
    %cst_22 = arith.constant dense<0.000000e+00> : vector<8x32xf32>
    %69 = tpu.matmul %67, %18, %cst_22 {dimension_numbers = #tpu.dot_dimension_numbers<[1], [0], [0], [1], [0, 0, 1, 1], [], []>} : vector<8x32xf32>, vector<32x32xf32>, vector<8x32xf32> -> vector<8x32xf32>
    %70 = vector.extract_strided_slice %23 {offsets = [16, 0], sizes = [8, 64], strides = [1, 1]} : vector<64x64xf32> to vector<8x64xf32>
    %71 = arith.addf %70, %68 : vector<8x64xf32>
    %72 = arith.negf %71 : vector<8x64xf32>
    %73 = math.exp %72 : vector<8x64xf32>
    %cst_23 = arith.constant 1.000000e+00 : f32
    %74 = vector.broadcast %cst_23 : f32 to vector<8x64xf32>
    %75 = arith.addf %74, %73 : vector<8x64xf32>
    %76 = arith.divf %74, %75 : vector<8x64xf32>
    %77 = vector.extract_strided_slice %76 {offsets = [0, 0], sizes = [8, 32], strides = [1, 1]} : vector<8x64xf32> to vector<8x32xf32>
    %78 = vector.extract_strided_slice %76 {offsets = [0, 32], sizes = [8, 32], strides = [1, 1]} : vector<8x64xf32> to vector<8x32xf32>
    %79 = vector.extract_strided_slice %24 {offsets = [16, 0], sizes = [8, 32], strides = [1, 1]} : vector<64x32xf32> to vector<8x32xf32>
    %80 = arith.addf %69, %14 : vector<8x32xf32>
    %81 = arith.mulf %77, %80 : vector<8x32xf32>
    %82 = arith.addf %79, %81 : vector<8x32xf32>
    %83 = math.tanh %82 : vector<8x32xf32>
    %cst_24 = arith.constant 1.000000e+00 : f32
    %84 = vector.broadcast %cst_24 : f32 to vector<8x32xf32>
    %85 = arith.subf %84, %78 : vector<8x32xf32>
    %86 = arith.mulf %85, %83 : vector<8x32xf32>
    %87 = arith.mulf %78, %67 : vector<8x32xf32>
    %88 = arith.addf %86, %87 : vector<8x32xf32>
    %cst_25 = arith.constant dense<0.000000e+00> : vector<8x64xf32>
    %89 = tpu.matmul %88, %17, %cst_25 {dimension_numbers = #tpu.dot_dimension_numbers<[1], [0], [0], [1], [0, 0, 1, 1], [], []>} : vector<8x32xf32>, vector<32x64xf32>, vector<8x64xf32> -> vector<8x64xf32>
    %cst_26 = arith.constant dense<0.000000e+00> : vector<8x32xf32>
    %90 = tpu.matmul %88, %18, %cst_26 {dimension_numbers = #tpu.dot_dimension_numbers<[1], [0], [0], [1], [0, 0, 1, 1], [], []>} : vector<8x32xf32>, vector<32x32xf32>, vector<8x32xf32> -> vector<8x32xf32>
    %91 = vector.extract_strided_slice %23 {offsets = [24, 0], sizes = [8, 64], strides = [1, 1]} : vector<64x64xf32> to vector<8x64xf32>
    %92 = arith.addf %91, %89 : vector<8x64xf32>
    %93 = arith.negf %92 : vector<8x64xf32>
    %94 = math.exp %93 : vector<8x64xf32>
    %cst_27 = arith.constant 1.000000e+00 : f32
    %95 = vector.broadcast %cst_27 : f32 to vector<8x64xf32>
    %96 = arith.addf %95, %94 : vector<8x64xf32>
    %97 = arith.divf %95, %96 : vector<8x64xf32>
    %98 = vector.extract_strided_slice %97 {offsets = [0, 0], sizes = [8, 32], strides = [1, 1]} : vector<8x64xf32> to vector<8x32xf32>
    %99 = vector.extract_strided_slice %97 {offsets = [0, 32], sizes = [8, 32], strides = [1, 1]} : vector<8x64xf32> to vector<8x32xf32>
    %100 = vector.extract_strided_slice %24 {offsets = [24, 0], sizes = [8, 32], strides = [1, 1]} : vector<64x32xf32> to vector<8x32xf32>
    %101 = arith.addf %90, %14 : vector<8x32xf32>
    %102 = arith.mulf %98, %101 : vector<8x32xf32>
    %103 = arith.addf %100, %102 : vector<8x32xf32>
    %104 = math.tanh %103 : vector<8x32xf32>
    %cst_28 = arith.constant 1.000000e+00 : f32
    %105 = vector.broadcast %cst_28 : f32 to vector<8x32xf32>
    %106 = arith.subf %105, %99 : vector<8x32xf32>
    %107 = arith.mulf %106, %104 : vector<8x32xf32>
    %108 = arith.mulf %99, %88 : vector<8x32xf32>
    %109 = arith.addf %107, %108 : vector<8x32xf32>
    %cst_29 = arith.constant dense<0.000000e+00> : vector<8x64xf32>
    %110 = tpu.matmul %109, %17, %cst_29 {dimension_numbers = #tpu.dot_dimension_numbers<[1], [0], [0], [1], [0, 0, 1, 1], [], []>} : vector<8x32xf32>, vector<32x64xf32>, vector<8x64xf32> -> vector<8x64xf32>
    %cst_30 = arith.constant dense<0.000000e+00> : vector<8x32xf32>
    %111 = tpu.matmul %109, %18, %cst_30 {dimension_numbers = #tpu.dot_dimension_numbers<[1], [0], [0], [1], [0, 0, 1, 1], [], []>} : vector<8x32xf32>, vector<32x32xf32>, vector<8x32xf32> -> vector<8x32xf32>
    %112 = vector.extract_strided_slice %23 {offsets = [32, 0], sizes = [8, 64], strides = [1, 1]} : vector<64x64xf32> to vector<8x64xf32>
    %113 = arith.addf %112, %110 : vector<8x64xf32>
    %114 = arith.negf %113 : vector<8x64xf32>
    %115 = math.exp %114 : vector<8x64xf32>
    %cst_31 = arith.constant 1.000000e+00 : f32
    %116 = vector.broadcast %cst_31 : f32 to vector<8x64xf32>
    %117 = arith.addf %116, %115 : vector<8x64xf32>
    %118 = arith.divf %116, %117 : vector<8x64xf32>
    %119 = vector.extract_strided_slice %118 {offsets = [0, 0], sizes = [8, 32], strides = [1, 1]} : vector<8x64xf32> to vector<8x32xf32>
    %120 = vector.extract_strided_slice %118 {offsets = [0, 32], sizes = [8, 32], strides = [1, 1]} : vector<8x64xf32> to vector<8x32xf32>
    %121 = vector.extract_strided_slice %24 {offsets = [32, 0], sizes = [8, 32], strides = [1, 1]} : vector<64x32xf32> to vector<8x32xf32>
    %122 = arith.addf %111, %14 : vector<8x32xf32>
    %123 = arith.mulf %119, %122 : vector<8x32xf32>
    %124 = arith.addf %121, %123 : vector<8x32xf32>
    %125 = math.tanh %124 : vector<8x32xf32>
    %cst_32 = arith.constant 1.000000e+00 : f32
    %126 = vector.broadcast %cst_32 : f32 to vector<8x32xf32>
    %127 = arith.subf %126, %120 : vector<8x32xf32>
    %128 = arith.mulf %127, %125 : vector<8x32xf32>
    %129 = arith.mulf %120, %109 : vector<8x32xf32>
    %130 = arith.addf %128, %129 : vector<8x32xf32>
    %cst_33 = arith.constant dense<0.000000e+00> : vector<8x64xf32>
    %131 = tpu.matmul %130, %17, %cst_33 {dimension_numbers = #tpu.dot_dimension_numbers<[1], [0], [0], [1], [0, 0, 1, 1], [], []>} : vector<8x32xf32>, vector<32x64xf32>, vector<8x64xf32> -> vector<8x64xf32>
    %cst_34 = arith.constant dense<0.000000e+00> : vector<8x32xf32>
    %132 = tpu.matmul %130, %18, %cst_34 {dimension_numbers = #tpu.dot_dimension_numbers<[1], [0], [0], [1], [0, 0, 1, 1], [], []>} : vector<8x32xf32>, vector<32x32xf32>, vector<8x32xf32> -> vector<8x32xf32>
    %133 = vector.extract_strided_slice %23 {offsets = [40, 0], sizes = [8, 64], strides = [1, 1]} : vector<64x64xf32> to vector<8x64xf32>
    %134 = arith.addf %133, %131 : vector<8x64xf32>
    %135 = arith.negf %134 : vector<8x64xf32>
    %136 = math.exp %135 : vector<8x64xf32>
    %cst_35 = arith.constant 1.000000e+00 : f32
    %137 = vector.broadcast %cst_35 : f32 to vector<8x64xf32>
    %138 = arith.addf %137, %136 : vector<8x64xf32>
    %139 = arith.divf %137, %138 : vector<8x64xf32>
    %140 = vector.extract_strided_slice %139 {offsets = [0, 0], sizes = [8, 32], strides = [1, 1]} : vector<8x64xf32> to vector<8x32xf32>
    %141 = vector.extract_strided_slice %139 {offsets = [0, 32], sizes = [8, 32], strides = [1, 1]} : vector<8x64xf32> to vector<8x32xf32>
    %142 = vector.extract_strided_slice %24 {offsets = [40, 0], sizes = [8, 32], strides = [1, 1]} : vector<64x32xf32> to vector<8x32xf32>
    %143 = arith.addf %132, %14 : vector<8x32xf32>
    %144 = arith.mulf %140, %143 : vector<8x32xf32>
    %145 = arith.addf %142, %144 : vector<8x32xf32>
    %146 = math.tanh %145 : vector<8x32xf32>
    %cst_36 = arith.constant 1.000000e+00 : f32
    %147 = vector.broadcast %cst_36 : f32 to vector<8x32xf32>
    %148 = arith.subf %147, %141 : vector<8x32xf32>
    %149 = arith.mulf %148, %146 : vector<8x32xf32>
    %150 = arith.mulf %141, %130 : vector<8x32xf32>
    %151 = arith.addf %149, %150 : vector<8x32xf32>
    %cst_37 = arith.constant dense<0.000000e+00> : vector<8x64xf32>
    %152 = tpu.matmul %151, %17, %cst_37 {dimension_numbers = #tpu.dot_dimension_numbers<[1], [0], [0], [1], [0, 0, 1, 1], [], []>} : vector<8x32xf32>, vector<32x64xf32>, vector<8x64xf32> -> vector<8x64xf32>
    %cst_38 = arith.constant dense<0.000000e+00> : vector<8x32xf32>
    %153 = tpu.matmul %151, %18, %cst_38 {dimension_numbers = #tpu.dot_dimension_numbers<[1], [0], [0], [1], [0, 0, 1, 1], [], []>} : vector<8x32xf32>, vector<32x32xf32>, vector<8x32xf32> -> vector<8x32xf32>
    %154 = vector.extract_strided_slice %23 {offsets = [48, 0], sizes = [8, 64], strides = [1, 1]} : vector<64x64xf32> to vector<8x64xf32>
    %155 = arith.addf %154, %152 : vector<8x64xf32>
    %156 = arith.negf %155 : vector<8x64xf32>
    %157 = math.exp %156 : vector<8x64xf32>
    %cst_39 = arith.constant 1.000000e+00 : f32
    %158 = vector.broadcast %cst_39 : f32 to vector<8x64xf32>
    %159 = arith.addf %158, %157 : vector<8x64xf32>
    %160 = arith.divf %158, %159 : vector<8x64xf32>
    %161 = vector.extract_strided_slice %160 {offsets = [0, 0], sizes = [8, 32], strides = [1, 1]} : vector<8x64xf32> to vector<8x32xf32>
    %162 = vector.extract_strided_slice %160 {offsets = [0, 32], sizes = [8, 32], strides = [1, 1]} : vector<8x64xf32> to vector<8x32xf32>
    %163 = vector.extract_strided_slice %24 {offsets = [48, 0], sizes = [8, 32], strides = [1, 1]} : vector<64x32xf32> to vector<8x32xf32>
    %164 = arith.addf %153, %14 : vector<8x32xf32>
    %165 = arith.mulf %161, %164 : vector<8x32xf32>
    %166 = arith.addf %163, %165 : vector<8x32xf32>
    %167 = math.tanh %166 : vector<8x32xf32>
    %cst_40 = arith.constant 1.000000e+00 : f32
    %168 = vector.broadcast %cst_40 : f32 to vector<8x32xf32>
    %169 = arith.subf %168, %162 : vector<8x32xf32>
    %170 = arith.mulf %169, %167 : vector<8x32xf32>
    %171 = arith.mulf %162, %151 : vector<8x32xf32>
    %172 = arith.addf %170, %171 : vector<8x32xf32>
    %cst_41 = arith.constant dense<0.000000e+00> : vector<8x64xf32>
    %173 = tpu.matmul %172, %17, %cst_41 {dimension_numbers = #tpu.dot_dimension_numbers<[1], [0], [0], [1], [0, 0, 1, 1], [], []>} : vector<8x32xf32>, vector<32x64xf32>, vector<8x64xf32> -> vector<8x64xf32>
    %cst_42 = arith.constant dense<0.000000e+00> : vector<8x32xf32>
    %174 = tpu.matmul %172, %18, %cst_42 {dimension_numbers = #tpu.dot_dimension_numbers<[1], [0], [0], [1], [0, 0, 1, 1], [], []>} : vector<8x32xf32>, vector<32x32xf32>, vector<8x32xf32> -> vector<8x32xf32>
    %175 = vector.extract_strided_slice %23 {offsets = [56, 0], sizes = [8, 64], strides = [1, 1]} : vector<64x64xf32> to vector<8x64xf32>
    %176 = arith.addf %175, %173 : vector<8x64xf32>
    %177 = arith.negf %176 : vector<8x64xf32>
    %178 = math.exp %177 : vector<8x64xf32>
    %cst_43 = arith.constant 1.000000e+00 : f32
    %179 = vector.broadcast %cst_43 : f32 to vector<8x64xf32>
    %180 = arith.addf %179, %178 : vector<8x64xf32>
    %181 = arith.divf %179, %180 : vector<8x64xf32>
    %182 = vector.extract_strided_slice %181 {offsets = [0, 0], sizes = [8, 32], strides = [1, 1]} : vector<8x64xf32> to vector<8x32xf32>
    %183 = vector.extract_strided_slice %181 {offsets = [0, 32], sizes = [8, 32], strides = [1, 1]} : vector<8x64xf32> to vector<8x32xf32>
    %184 = vector.extract_strided_slice %24 {offsets = [56, 0], sizes = [8, 32], strides = [1, 1]} : vector<64x32xf32> to vector<8x32xf32>
    %185 = arith.addf %174, %14 : vector<8x32xf32>
    %186 = arith.mulf %182, %185 : vector<8x32xf32>
    %187 = arith.addf %184, %186 : vector<8x32xf32>
    %188 = math.tanh %187 : vector<8x32xf32>
    %cst_44 = arith.constant 1.000000e+00 : f32
    %189 = vector.broadcast %cst_44 : f32 to vector<8x32xf32>
    %190 = arith.subf %189, %183 : vector<8x32xf32>
    %191 = arith.mulf %190, %188 : vector<8x32xf32>
    %192 = arith.mulf %183, %172 : vector<8x32xf32>
    %193 = arith.addf %191, %192 : vector<8x32xf32>
    %c0_45 = arith.constant 0 : index
    %c0_46 = arith.constant 0 : index
    %194 = vector.load %arg8[%c0_45, %c0_46] : memref<8x32xf32, #tpu.memory_space<vmem>>, vector<8x32xf32>
    tpu.vector_store %arg8[%c0_45, %c0_46], %193 {strides = array<i32>} : memref<8x32xf32, #tpu.memory_space<vmem>>, vector<8x32xf32>,
    %c0_47 = arith.constant 0 : index
    %c0_48 = arith.constant 0 : index
    %195 = vector.load %arg6[%c0_47, %c0_48] : memref<32x128xf32, #tpu.memory_space<vmem>>, vector<32x128xf32>
    %cst_49 = arith.constant dense<0.000000e+00> : vector<8x128xf32>
    %196 = tpu.matmul %46, %195, %cst_49 {dimension_numbers = #tpu.dot_dimension_numbers<[1], [0], [0], [1], [0, 0, 1, 1], [], []>} : vector<8x32xf32>, vector<32x128xf32>, vector<8x128xf32> -> vector<8x128xf32>
    %197 = vector.broadcast %15 : vector<1x128xf32> to vector<8x128xf32>
    %198 = arith.addf %196, %197 : vector<8x128xf32>
    %cst_50 = arith.constant dense<0xFF800000> : vector<8xf32>
    %199 = vector.multi_reduction <maximumf>, %198, %cst_50 [1] : vector<8x128xf32> to vector<8xf32>
    %200 = vector.shape_cast %199 : vector<8xf32> to vector<8x1xf32>
    %201 = vector.broadcast %200 : vector<8x1xf32> to vector<8x128xf32>
    %202 = arith.subf %198, %201 : vector<8x128xf32>
    %203 = math.exp %202 : vector<8x128xf32>
    %cst_51 = arith.constant dense<0.000000e+00> : vector<8xf32>
    %204 = vector.multi_reduction <add>, %203, %cst_51 [1] : vector<8x128xf32> to vector<8xf32>
    %205 = vector.shape_cast %204 : vector<8xf32> to vector<8x1xf32>
    %206 = math.log %205 : vector<8x1xf32>
    %207 = vector.broadcast %206 : vector<8x1xf32> to vector<8x128xf32>
    %208 = arith.subf %202, %207 : vector<8x128xf32>
    %c0_52 = arith.constant 0 : index
    %c0_53 = arith.constant 0 : index
    %209 = vector.load %arg7[%c0_52, %c0_53] : memref<8x128xf32, #tpu.memory_space<vmem>>, vector<8x128xf32>
    tpu.vector_store %arg7[%c0_52, %c0_53], %208 {strides = array<i32>} : memref<8x128xf32, #tpu.memory_space<vmem>>, vector<8x128xf32>,
    return
  }
}

</mosaic_0001>

<llo_original>
// kernel: decoder_forward.1
$region0: #{decoder_forward.1}
  #allocation0 [shape = 'u32[]', space=smem, size = 0x4, offset = 0x4, fixed_abs, tag = 'smem constant byte address 0x4 - core index']
  #allocation1 [shape = 'u32[144,128]{1,0:T(1,128)}', space=vmem, size = 0x12000, scoped, tag = 'internal scratch']
  %s0 = inlined_call_operand.vmem [shape: s32[64,1], index: 0, kind: input, shape index: {}]
  %s1 = inlined_call_operand.hbm [shape: f32[16,32], index: 1, kind: input, shape index: {}]
  %s2 = inlined_call_operand.hbm [shape: f32[8,32], index: 2, kind: input, shape index: {}]
  %s3 = inlined_call_operand.vmem [shape: f32[32,96], index: 3, kind: input, shape index: {}]
  %s4 = inlined_call_operand.vmem [shape: f32[32,96], index: 4, kind: input, shape index: {}]
  %s5 = inlined_call_operand.hbm [shape: f32[2,128], index: 5, kind: input, shape index: {}]
  %s6 = inlined_call_operand.vmem [shape: f32[32,128], index: 6, kind: input, shape index: {}]
  %s7 = inlined_call_operand.hbm [shape: f32[8,128], index: 7, kind: output, shape index: {0}]
  %s8 = inlined_call_operand.hbm [shape: f32[8,32], index: 8, kind: output, shape index: {1}]
  %9 = xla_tuple %s7, %s8
  %s10 = sld [smem:[#allocation0]]
  $region58: #{decoder_forward.1} parent=0
    _
  %s12 = ssub.s32 1, %s10
  %s13 = scalar_select 0, %s12, %s10
  $region1: #{decoder_forward.1} parent=0
    #allocation2 [shape = 'u8[8192]{0}', space=vmem, size = 0x2000, scoped, tag = 'input window, operand 1, single buffered']
    #allocation3 [shape = 's32[1]{0}', space=sflag, size = 0x4, scoped, tag = 'scoped memory for decoder_forward.1']
    #allocation4 [shape = 's32[1]{0}', space=sflag, size = 0x4, scoped, tag = 'scoped memory for decoder_forward.1']
    #allocation5 [shape = 'u8[4096]{0}', space=vmem, size = 0x1000, scoped, tag = 'input window, operand 2, single buffered']
    #allocation6 [shape = 's32[1]{0}', space=sflag, size = 0x4, scoped, tag = 'scoped memory for decoder_forward.1']
    #allocation7 [shape = 'u8[1024]{0}', space=vmem, size = 0x400, scoped, tag = 'input window, operand 5, single buffered']
    #allocation8 [shape = 'u8[4096]{0}', space=vmem, size = 0x1000, scoped, tag = 'output window, operand 0, single buffered']
    #allocation9 [shape = 'u8[4096]{0}', space=vmem, size = 0x1000, scoped, tag = 'output window, operand 1, single buffered']
    #allocation10 [shape = 's32[1]{0}', space=sflag, size = 0x4, scoped, tag = 'scoped memory for decoder_forward.1']
    %14 = vsyncpa [#allocation3], 0
    %15 = vsyncpa [#allocation6], 0
    %16 = vsyncpa [#allocation4], 0
    %17 = vsyncpa [#allocation10], 0
    // Predicated region
    $region2: #{decoder_forward.1} parent=1 // pred_check
      _
    $region3: #{decoder_forward.1} parent=1 // pred_check_branch
      %19 = sbr.rel (0) target = $region5
    $region4: #{decoder_forward.1} parent=1 // pred_region
      _
    $region5: #{decoder_forward.1} parent=1 // pred_fallthru
      _
    // Predicated region
    $region6: #{decoder_forward.1} parent=1 // pred_check
      _
    $region7: #{decoder_forward.1} parent=1 // pred_check_branch
      %21 = sbr.rel (0) target = $region9
    $region8: #{decoder_forward.1} parent=1 // pred_region
      %s23 = ssub.s32 256, 256
      %24 = vsyncadd [#allocation3], %s23
      %s25 = sshll.u32 [#allocation2], 4
      %s26 = int_to_ptr.vmem [resolvable:$true] %s25
      %31 = dma.hbm_to_vmem [thread:$0]  %s1, 256, %s26, [#allocation3], 128, 128, 8
    $region9: #{decoder_forward.1} parent=1 // pred_fallthru
      _
    // Predicated region
    $region10: #{decoder_forward.1} parent=1 // pred_check
      _
    $region11: #{decoder_forward.1} parent=1 // pred_check_branch
      %33 = sbr.rel (0) target = $region13
    $region12: #{decoder_forward.1} parent=1 // pred_region
      %s35 = ssub.s32 128, 128
      %36 = vsyncadd [#allocation6], %s35
      %s38 = sshll.u32 [#allocation5], 4
      %s39 = int_to_ptr.vmem [resolvable:$true] %s38
      %41 = dma.hbm_to_vmem [thread:$0]  %s2, 128, %s39, [#allocation6]
    $region13: #{decoder_forward.1} parent=1 // pred_fallthru
      _
    // Predicated region
    $region14: #{decoder_forward.1} parent=1 // pred_check
      _
    $region15: #{decoder_forward.1} parent=1 // pred_check_branch
      %43 = sbr.rel (0) target = $region17
    $region16: #{decoder_forward.1} parent=1 // pred_region
      _
    $region17: #{decoder_forward.1} parent=1 // pred_fallthru
      _
    // Predicated region
    $region18: #{decoder_forward.1} parent=1 // pred_check
      _
    $region19: #{decoder_forward.1} parent=1 // pred_check_branch
      %45 = sbr.rel (0) target = $region21
    $region20: #{decoder_forward.1} parent=1 // pred_region
      _
    $region21: #{decoder_forward.1} parent=1 // pred_fallthru
      _
    // Predicated region
    $region22: #{decoder_forward.1} parent=1 // pred_check
      _
    $region23: #{decoder_forward.1} parent=1 // pred_check_branch
      %47 = sbr.rel (0) target = $region25
    $region24: #{decoder_forward.1} parent=1 // pred_region
      %s49 = ssub.s32 32, 32
      %50 = vsyncadd [#allocation6], %s49
      %s52 = sshll.u32 [#allocation7], 4
      %s53 = int_to_ptr.vmem [resolvable:$true] %s52
      %55 = dma.hbm_to_vmem [thread:$0]  %s5, 32, %s53, [#allocation6]
    $region25: #{decoder_forward.1} parent=1 // pred_fallthru
      _
    // Predicated region
    $region26: #{decoder_forward.1} parent=1 // pred_check
      _
    $region27: #{decoder_forward.1} parent=1 // pred_check_branch
      %57 = sbr.rel (0) target = $region29
    $region28: #{decoder_forward.1} parent=1 // pred_region
      _
    $region29: #{decoder_forward.1} parent=1 // pred_fallthru
      _
    // Predicated region
    $region30: #{decoder_forward.1} parent=1 // pred_check
      _
    $region31: #{decoder_forward.1} parent=1 // pred_check_branch
      %59 = sbr.rel (0) target = $region33
    $region32: #{decoder_forward.1} parent=1 // pred_region
      %60 = dma.done [#allocation3], 256
    $region33: #{decoder_forward.1} parent=1 // pred_fallthru
      _
    // Predicated region
    $region34: #{decoder_forward.1} parent=1 // pred_check
      _
    $region35: #{decoder_forward.1} parent=1 // pred_check_branch
      %62 = sbr.rel (0) target = $region37
    $region36: #{decoder_forward.1} parent=1 // pred_region
      %63 = dma.done [#allocation6], 128
    $region37: #{decoder_forward.1} parent=1 // pred_fallthru
      _
    // Predicated region
    $region38: #{decoder_forward.1} parent=1 // pred_check
      _
    $region39: #{decoder_forward.1} parent=1 // pred_check_branch
      %65 = sbr.rel (0) target = $region41
    $region40: #{decoder_forward.1} parent=1 // pred_region
      %66 = dma.done [#allocation6], 32
    $region41: #{decoder_forward.1} parent=1 // pred_fallthru
      _
    %v67 = vld [vmem:[%s0] sm:$0xff]
    %v68 = vld [vmem:[%s0 + $0x8] sm:$0xff]
    %v69 = vld [vmem:[%s0 + $0x10] sm:$0xff]
    %v70 = vld [vmem:[%s0 + $0x18] sm:$0xff]
    %v71 = vld [vmem:[%s0 + $0x20] sm:$0xff]
    %v72 = vld [vmem:[%s0 + $0x28] sm:$0xff]
    %v73 = vld [vmem:[%s0 + $0x30] sm:$0xff]
    %v74 = vld [vmem:[%s0 + $0x38] sm:$0xff]
    %v75 = vlaneseq
    %v76 = vand.u32 %v75, 127
    %77 = vset.pattern.permute.xlu0 0
    %78 = vperm.xlu0 %77, %v67
    %v79 = vpop.permute.xlu0 %78
    %80 = vset.pattern.permute.xlu0 0
    %81 = vperm.xlu0 %80, %v68
    %v82 = vpop.permute.xlu0 %81
    %83 = vset.pattern.permute.xlu0 0
    %84 = vperm.xlu0 %83, %v69
    %v85 = vpop.permute.xlu0 %84
    %86 = vset.pattern.permute.xlu0 0
    %87 = vperm.xlu0 %86, %v70
    %v88 = vpop.permute.xlu0 %87
    %89 = vset.pattern.permute.xlu0 0
    %90 = vperm.xlu0 %89, %v71
    %v91 = vpop.permute.xlu0 %90
    %92 = vset.pattern.permute.xlu0 0
    %93 = vperm.xlu0 %92, %v72
    %v94 = vpop.permute.xlu0 %93
    %95 = vset.pattern.permute.xlu0 0
    %96 = vperm.xlu0 %95, %v73
    %v97 = vpop.permute.xlu0 %96
    %98 = vset.pattern.permute.xlu0 0
    %99 = vperm.xlu0 %98, %v74
    %v100 = vpop.permute.xlu0 %99
    %vm101 = vcmp.eq.s32.totalorder %v76, %v79
    %vm102 = vcmp.eq.s32.totalorder %v76, %v82
    %vm103 = vcmp.eq.s32.totalorder %v76, %v85
    %vm104 = vcmp.eq.s32.totalorder %v76, %v88
    %vm105 = vcmp.eq.s32.totalorder %v76, %v91
    %vm106 = vcmp.eq.s32.totalorder %v76, %v94
    %vm107 = vcmp.eq.s32.totalorder %v76, %v97
    %vm108 = vcmp.eq.s32.totalorder %v76, %v100
    %v109 = vsel %vm101, 1, 0
    %v110 = vsel %vm102, 1, 0
    %v111 = vsel %vm103, 1, 0
    %v112 = vsel %vm104, 1, 0
    %v113 = vsel %vm105, 1, 0
    %v114 = vsel %vm106, 1, 0
    %v115 = vsel %vm107, 1, 0
    %v116 = vsel %vm108, 1, 0
    %v117 = vcvt.s32.f32 %v109
    %v118 = vcvt.s32.f32 %v110
    %v119 = vcvt.s32.f32 %v111
    %v120 = vcvt.s32.f32 %v112
    %v121 = vcvt.s32.f32 %v113
    %v122 = vcvt.s32.f32 %v114
    %v123 = vcvt.s32.f32 %v115
    %v124 = vcvt.s32.f32 %v116
    %v125 = vld [vmem:[#allocation2] sm:$0xff]
    %v126 = vld [vmem:[#allocation2 + $0x8] sm:$0xff]
    %vm127 = vcmask 130048
    %v129 = vsel %vm127, %v117, 0
    %v132 = vsel %vm127, %v118, 0
    %v135 = vsel %vm127, %v119, 0
    %v138 = vsel %vm127, %v120, 0
    %v141 = vsel %vm127, %v121, 0
    %v144 = vsel %vm127, %v122, 0
    %v147 = vsel %vm127, %v123, 0
    %v150 = vsel %vm127, %v124, 0
    %152 = vmatprep.subr.mxu0 0.0
    %153 = vmatpush1.msra.mxu0 0.0
    %154 = vmatprep.subr.mxu0 0.0
    %155 = vmatpush1.msra.mxu0 0.0
    %156 = vmatprep.subr.mxu0 0.0
    %157 = vmatpush1.msra.mxu0 0.0
    %158 = vmatprep.subr.mxu0 0.0
    %159 = vmatpush1.msra.mxu0 0.0
    %160 = vmatprep.subr.mxu0 0.0
    %161 = vmatpush1.msra.mxu0 0.0
    %162 = vmatprep.subr.mxu0 0.0
    %163 = vmatpush1.msra.mxu0 0.0
    %164 = vmatprep.subr.mxu0 0.0
    %165 = vmatpush1.msra.mxu0 0.0
    %166 = vmatprep.subr.mxu0 0.0
    %167 = vmatpush1.msra.mxu0 0.0
    %168 = vmatprep.subr.mxu0 0.0
    %169 = vmatpush1.msra.mxu0 0.0
    %170 = vmatprep.subr.mxu0 0.0
    %171 = vmatpush1.msra.mxu0 0.0
    %172 = vmatprep.subr.mxu0 0.0
    %173 = vmatpush1.msra.mxu0 0.0
    %174 = vmatprep.subr.mxu0 0.0
    %175 = vmatpush1.msra.mxu0 0.0
    %176 = vmatprep.subr.mxu0 0.0
    %177 = vmatpush1.msra.mxu0 0.0
    %178 = vmatprep.subr.mxu0 0.0
    %179 = vmatpush1.msra.mxu0 0.0
    %180 = vmatprep.subr.mxu0 0.0
    %181 = vmatpush1.msra.mxu0 %v126
    %182 = vmatprep.subr.mxu0 0.0
    %183 = vmatpush1.msra.mxu0 %v125
    %184 = vmatprep.subr.mxu0 0.0
    %185 = vmatpush2.msra.mxu0 0.0
    %186 = vmatprep.subr.mxu0 0.0
    %187 = vmatpush2.msra.mxu0 0.0
    %188 = vmatprep.subr.mxu0 0.0
    %189 = vmatpush2.msra.mxu0 0.0
    %190 = vmatprep.subr.mxu0 0.0
    %191 = vmatpush2.msra.mxu0 0.0
    %192 = vmatprep.subr.mxu0 0.0
    %193 = vmatpush2.msra.mxu0 0.0
    %194 = vmatprep.subr.mxu0 0.0
    %195 = vmatpush2.msra.mxu0 0.0
    %196 = vmatprep.subr.mxu0 0.0
    %197 = vmatpush2.msra.mxu0 0.0
    %198 = vmatprep.subr.mxu0 0.0
    %199 = vmatpush2.msra.mxu0 0.0
    %200 = vmatprep.subr.mxu0 0.0
    %201 = vmatpush2.msra.mxu0 0.0
    %202 = vmatprep.subr.mxu0 0.0
    %203 = vmatpush2.msra.mxu0 0.0
    %204 = vmatprep.subr.mxu0 0.0
    %205 = vmatpush2.msra.mxu0 0.0
    %206 = vmatprep.subr.mxu0 0.0
    %207 = vmatpush2.msra.mxu0 0.0
    %208 = vmatprep.subr.mxu0 0.0
    %209 = vmatpush2.msra.mxu0 0.0
    %210 = vmatprep.subr.mxu0 0.0
    %211 = vmatpush2.msra.mxu0 0.0
    %212 = vmatprep.subr.mxu0 0.0
    %213 = vmatpush2.msra.mxu0 0.0
    %214 = vmatprep.subr.mxu0 0.0
    %215 = vmatpush2.msra.mxu0 0.0
    %216 = vmatprep.mubr.f32.mxu0 0.0
    %217 = vmatmul.mubr.f32.gmra.mxu0 %v129
    %v218 = vpop.f32.mrf.mxu0
    %v219 = vadd.f32 0.0, %v218
    %v220 = vpop.f32.mrf.mxu0
    %221 = vmatprep.mubr.f32.mxu0 0.0
    %222 = vmatmul.mubr.f32.gmra.mxu0 %v132
    %v223 = vpop.f32.mrf.mxu0
    %v224 = vadd.f32 0.0, %v223
    %v225 = vpop.f32.mrf.mxu0
    %226 = vmatprep.mubr.f32.mxu0 0.0
    %227 = vmatmul.mubr.f32.gmra.mxu0 %v135
    %v228 = vpop.f32.mrf.mxu0
    %v229 = vadd.f32 0.0, %v228
    %v230 = vpop.f32.mrf.mxu0
    %231 = vmatprep.mubr.f32.mxu0 0.0
    %232 = vmatmul.mubr.f32.gmra.mxu0 %v138
    %v233 = vpop.f32.mrf.mxu0
    %v234 = vadd.f32 0.0, %v233
    %v235 = vpop.f32.mrf.mxu0
    %236 = vmatprep.mubr.f32.mxu0 0.0
    %237 = vmatmul.mubr.f32.gmra.mxu0 %v141
    %v238 = vpop.f32.mrf.mxu0
    %v239 = vadd.f32 0.0, %v238
    %v240 = vpop.f32.mrf.mxu0
    %241 = vmatprep.mubr.f32.mxu0 0.0
    %242 = vmatmul.mubr.f32.gmra.mxu0 %v144
    %v243 = vpop.f32.mrf.mxu0
    %v244 = vadd.f32 0.0, %v243
    %v245 = vpop.f32.mrf.mxu0
    %246 = vmatprep.mubr.f32.mxu0 0.0
    %247 = vmatmul.mubr.f32.gmra.mxu0 %v147
    %v248 = vpop.f32.mrf.mxu0
    %v249 = vadd.f32 0.0, %v248
    %v250 = vpop.f32.mrf.mxu0
    %251 = vmatprep.mubr.f32.mxu0 0.0
    %252 = vmatmul.mubr.f32.gmra.mxu0 %v150
    %v253 = vpop.f32.mrf.mxu0
    %v254 = vadd.f32 0.0, %v253
    %v255 = vpop.f32.mrf.mxu0
    %256 = vdwg.mxu0
    %v257 = vmax.f32 %v219, 0.0
    %v258 = vmax.f32 %v224, 0.0
    %v259 = vmax.f32 %v229, 0.0
    %v260 = vmax.f32 %v234, 0.0
    %v261 = vmax.f32 %v239, 0.0
    %v262 = vmax.f32 %v244, 0.0
    %v263 = vmax.f32 %v249, 0.0
    %v264 = vmax.f32 %v254, 0.0
    %v265 = vld [vmem:[#allocation7] sm:$0x3]
    %v266 = vlaneseq
    %v267 = vshrl.u32 %v266, 7
    %v268 = vsub.s32 0, %v267
    %v269 = vrot.slane %v265, %v268
    %v270 = vld [vmem:[%s4] sm:$0xff]
    %v271 = vld [vmem:[%s4 + $0x8] sm:$0xff]
    %v272 = vld [vmem:[%s4 + $0x10] sm:$0xff]
    %v273 = vld [vmem:[%s4 + $0x18] sm:$0xff]
    %v274 = vld [vmem:[%s3] sm:$0xff]
    %v275 = vld [vmem:[%s3 + $0x8] sm:$0xff]
    %v276 = vld [vmem:[%s3 + $0x10] sm:$0xff]
    %v277 = vld [vmem:[%s3 + $0x18] sm:$0xff]
    %vm278 = vcmask 261120
    %v280 = vsel %vm278, %v257, 0
    %v283 = vsel %vm278, %v258, 0
    %v286 = vsel %vm278, %v259, 0
    %v289 = vsel %vm278, %v260, 0
    %v292 = vsel %vm278, %v261, 0
    %v295 = vsel %vm278, %v262, 0
    %v298 = vsel %vm278, %v263, 0
    %v301 = vsel %vm278, %v264, 0
    %303 = vmatprep.subr.mxu0 0.0
    %304 = vmatpush1.msra.mxu0 0.0
    %305 = vmatprep.subr.mxu0 0.0
    %306 = vmatpush1.msra.mxu0 0.0
    %307 = vmatprep.subr.mxu0 0.0
    %308 = vmatpush1.msra.mxu0 0.0
    %309 = vmatprep.subr.mxu0 0.0
    %310 = vmatpush1.msra.mxu0 0.0
    %311 = vmatprep.subr.mxu0 0.0
    %312 = vmatpush1.msra.mxu0 0.0
    %313 = vmatprep.subr.mxu0 0.0
    %314 = vmatpush1.msra.mxu0 0.0
    %315 = vmatprep.subr.mxu0 0.0
    %316 = vmatpush1.msra.mxu0 0.0
    %317 = vmatprep.subr.mxu0 0.0
    %318 = vmatpush1.msra.mxu0 0.0
    %319 = vmatprep.subr.mxu0 0.0
    %320 = vmatpush1.msra.mxu0 0.0
    %321 = vmatprep.subr.mxu0 0.0
    %322 = vmatpush1.msra.mxu0 0.0
    %323 = vmatprep.subr.mxu0 0.0
    %324 = vmatpush1.msra.mxu0 0.0
    %325 = vmatprep.subr.mxu0 0.0
    %326 = vmatpush1.msra.mxu0 0.0
    %327 = vmatprep.subr.mxu0 0.0
    %328 = vmatpush1.msra.mxu0 %v277
    %329 = vmatprep.subr.mxu0 0.0
    %330 = vmatpush1.msra.mxu0 %v276
    %331 = vmatprep.subr.mxu0 0.0
    %332 = vmatpush1.msra.mxu0 %v275
    %333 = vmatprep.subr.mxu0 0.0
    %334 = vmatpush1.msra.mxu0 %v274
    %335 = vmatprep.subr.mxu0 0.0
    %336 = vmatpush2.msra.mxu0 0.0
    %337 = vmatprep.subr.mxu0 0.0
    %338 = vmatpush2.msra.mxu0 0.0
    %339 = vmatprep.subr.mxu0 0.0
    %340 = vmatpush2.msra.mxu0 0.0
    %341 = vmatprep.subr.mxu0 0.0
    %342 = vmatpush2.msra.mxu0 0.0
    %343 = vmatprep.subr.mxu0 0.0
    %344 = vmatpush2.msra.mxu0 0.0
    %345 = vmatprep.subr.mxu0 0.0
    %346 = vmatpush2.msra.mxu0 0.0
    %347 = vmatprep.subr.mxu0 0.0
    %348 = vmatpush2.msra.mxu0 0.0
    %349 = vmatprep.subr.mxu0 0.0
    %350 = vmatpush2.msra.mxu0 0.0
    %351 = vmatprep.subr.mxu0 0.0
    %352 = vmatpush2.msra.mxu0 0.0
    %353 = vmatprep.subr.mxu0 0.0
    %354 = vmatpush2.msra.mxu0 0.0
    %355 = vmatprep.subr.mxu0 0.0
    %356 = vmatpush2.msra.mxu0 0.0
    %357 = vmatprep.subr.mxu0 0.0
    %358 = vmatpush2.msra.mxu0 0.0
    %359 = vmatprep.subr.mxu0 0.0
    %360 = vmatpush2.msra.mxu0 0.0
    %361 = vmatprep.subr.mxu0 0.0
    %362 = vmatpush2.msra.mxu0 0.0
    %363 = vmatprep.subr.mxu0 0.0
    %364 = vmatpush2.msra.mxu0 0.0
    %365 = vmatprep.subr.mxu0 0.0
    %366 = vmatpush2.msra.mxu0 0.0
    %367 = vmatprep.mubr.f32.mxu0 0.0
    %368 = vmatmul.mubr.f32.gmra.mxu0 %v280
    %v369 = vpop.f32.mrf.mxu0
    %v370 = vadd.f32 %v269, %v369
    %v371 = vpop.f32.mrf.mxu0
    %372 = vmatprep.mubr.f32.mxu0 0.0
    %373 = vmatmul.mubr.f32.gmra.mxu0 %v283
    %v374 = vpop.f32.mrf.mxu0
    %v375 = vadd.f32 %v269, %v374
    %v376 = vpop.f32.mrf.mxu0
    %377 = vmatprep.mubr.f32.mxu0 0.0
    %378 = vmatmul.mubr.f32.gmra.mxu0 %v286
    %v379 = vpop.f32.mrf.mxu0
    %v380 = vadd.f32 %v269, %v379
    %v381 = vpop.f32.mrf.mxu0
    %382 = vmatprep.mubr.f32.mxu0 0.0
    %383 = vmatmul.mubr.f32.gmra.mxu0 %v289
    %v384 = vpop.f32.mrf.mxu0
    %v385 = vadd.f32 %v269, %v384
    %v386 = vpop.f32.mrf.mxu0
    %387 = vmatprep.mubr.f32.mxu0 0.0
    %388 = vmatmul.mubr.f32.gmra.mxu0 %v292
    %v389 = vpop.f32.mrf.mxu0
    %v390 = vadd.f32 %v269, %v389
    %v391 = vpop.f32.mrf.mxu0
    %392 = vmatprep.mubr.f32.mxu0 0.0
    %393 = vmatmul.mubr.f32.gmra.mxu0 %v295
    %v394 = vpop.f32.mrf.mxu0
    %v395 = vadd.f32 %v269, %v394
    %v396 = vpop.f32.mrf.mxu0
    %397 = vmatprep.mubr.f32.mxu0 0.0
    %398 = vmatmul.mubr.f32.gmra.mxu0 %v298
    %v399 = vpop.f32.mrf.mxu0
    %v400 = vadd.f32 %v269, %v399
    %v401 = vpop.f32.mrf.mxu0
    %402 = vmatprep.mubr.f32.mxu0 0.0
    %403 = vmatmul.mubr.f32.gmra.mxu0 %v301
    %v404 = vpop.f32.mrf.mxu0
    %v405 = vadd.f32 %v269, %v404
    %v406 = vpop.f32.mrf.mxu0
    %407 = vdwg.mxu0
    %v408 = vld [vmem:[#allocation5] sm:$0xff]
    %v410 = vsel %vm278, %v408, 0
    %412 = vmatprep.subr.mxu0 0.0
    %413 = vmatpush1.msra.mxu0 0.0
    %414 = vmatprep.subr.mxu0 0.0
    %415 = vmatpush1.msra.mxu0 0.0
    %416 = vmatprep.subr.mxu0 0.0
    %417 = vmatpush1.msra.mxu0 0.0
    %418 = vmatprep.subr.mxu0 0.0
    %419 = vmatpush1.msra.mxu0 0.0
    %420 = vmatprep.subr.mxu0 0.0
    %421 = vmatpush1.msra.mxu0 0.0
    %422 = vmatprep.subr.mxu0 0.0
    %423 = vmatpush1.msra.mxu0 0.0
    %424 = vmatprep.subr.mxu0 0.0
    %425 = vmatpush1.msra.mxu0 0.0
    %426 = vmatprep.subr.mxu0 0.0
    %427 = vmatpush1.msra.mxu0 0.0
    %428 = vmatprep.subr.mxu0 0.0
    %429 = vmatpush1.msra.mxu0 0.0
    %430 = vmatprep.subr.mxu0 0.0
    %431 = vmatpush1.msra.mxu0 0.0
    %432 = vmatprep.subr.mxu0 0.0
    %433 = vmatpush1.msra.mxu0 0.0
    %434 = vmatprep.subr.mxu0 0.0
    %435 = vmatpush1.msra.mxu0 0.0
    %436 = vmatprep.subr.mxu0 0.0
    %437 = vmatpush1.msra.mxu0 %v273
    %438 = vmatprep.subr.mxu0 0.0
    %439 = vmatpush1.msra.mxu0 %v272
    %440 = vmatprep.subr.mxu0 0.0
    %441 = vmatpush1.msra.mxu0 %v271
    %442 = vmatprep.subr.mxu0 0.0
    %443 = vmatpush1.msra.mxu0 %v270
    %444 = vmatprep.subr.mxu0 0.0
    %445 = vmatpush2.msra.mxu0 0.0
    %446 = vmatprep.subr.mxu0 0.0
    %447 = vmatpush2.msra.mxu0 0.0
    %448 = vmatprep.subr.mxu0 0.0
    %449 = vmatpush2.msra.mxu0 0.0
    %450 = vmatprep.subr.mxu0 0.0
    %451 = vmatpush2.msra.mxu0 0.0
    %452 = vmatprep.subr.mxu0 0.0
    %453 = vmatpush2.msra.mxu0 0.0
    %454 = vmatprep.subr.mxu0 0.0
    %455 = vmatpush2.msra.mxu0 0.0
    %456 = vmatprep.subr.mxu0 0.0
    %457 = vmatpush2.msra.mxu0 0.0
    %458 = vmatprep.subr.mxu0 0.0
    %459 = vmatpush2.msra.mxu0 0.0
    %460 = vmatprep.subr.mxu0 0.0
    %461 = vmatpush2.msra.mxu0 0.0
    %462 = vmatprep.subr.mxu0 0.0
    %463 = vmatpush2.msra.mxu0 0.0
    %464 = vmatprep.subr.mxu0 0.0
    %465 = vmatpush2.msra.mxu0 0.0
    %466 = vmatprep.subr.mxu0 0.0
    %467 = vmatpush2.msra.mxu0 0.0
    %468 = vmatprep.subr.mxu0 0.0
    %469 = vmatpush2.msra.mxu0 0.0
    %470 = vmatprep.subr.mxu0 0.0
    %471 = vmatpush2.msra.mxu0 0.0
    %472 = vmatprep.subr.mxu0 0.0
    %473 = vmatpush2.msra.mxu0 0.0
    %474 = vmatprep.subr.mxu0 0.0
    %475 = vmatpush2.msra.mxu0 0.0
    %476 = vmatprep.mubr.f32.mxu0 0.0
    %477 = vmatmul.mubr.f32.gmra.mxu0 %v410
    %v478 = vpop.f32.mrf.mxu0
    %v479 = vadd.f32 0.0, %v478
    %v480 = vpop.f32.mrf.mxu0
    %481 = vdwg.mxu0
    %v482 = vadd.f32 %v370, %v479
    %v483 = vxor.u32 %v482, 2147483648
    %v484 = vmul.f32 %v483, 1.442695
    %v485 = vpow.pop %v484
    %v486 = vadd.f32 %v485, 1.0
    %v487 = vrcp.pop %v486
    %v488 = vmul.f32 1.0, %v487
    %493 = vrot.lane.b32.xlu0 %v270, 64
    %v494 = vpop.permute.xlu0 %493
    %495 = vrot.lane.b32.xlu0 %v271, 64
    %v496 = vpop.permute.xlu0 %495
    %497 = vrot.lane.b32.xlu0 %v272, 64
    %v498 = vpop.permute.xlu0 %497
    %499 = vrot.lane.b32.xlu0 %v273, 64
    %v500 = vpop.permute.xlu0 %499
    %506 = vrot.lane.b32.xlu0 %v269, 32
    %v507 = vpop.permute.xlu0 %506
    %509 = vmatprep.subr.mxu0 0.0
    %510 = vmatpush1.msra.mxu0 0.0
    %511 = vmatprep.subr.mxu0 0.0
    %512 = vmatpush1.msra.mxu0 0.0
    %513 = vmatprep.subr.mxu0 0.0
    %514 = vmatpush1.msra.mxu0 0.0
    %515 = vmatprep.subr.mxu0 0.0
    %516 = vmatpush1.msra.mxu0 0.0
    %517 = vmatprep.subr.mxu0 0.0
    %518 = vmatpush1.msra.mxu0 0.0
    %519 = vmatprep.subr.mxu0 0.0
    %520 = vmatpush1.msra.mxu0 0.0
    %521 = vmatprep.subr.mxu0 0.0
    %522 = vmatpush1.msra.mxu0 0.0
    %523 = vmatprep.subr.mxu0 0.0
    %524 = vmatpush1.msra.mxu0 0.0
    %525 = vmatprep.subr.mxu0 0.0
    %526 = vmatpush1.msra.mxu0 0.0
    %527 = vmatprep.subr.mxu0 0.0
    %528 = vmatpush1.msra.mxu0 0.0
    %529 = vmatprep.subr.mxu0 0.0
    %530 = vmatpush1.msra.mxu0 0.0
    %531 = vmatprep.subr.mxu0 0.0
    %532 = vmatpush1.msra.mxu0 0.0
    %533 = vmatprep.subr.mxu0 0.0
    %534 = vmatpush1.msra.mxu0 %v500
    %535 = vmatprep.subr.mxu0 0.0
    %536 = vmatpush1.msra.mxu0 %v498
    %537 = vmatprep.subr.mxu0 0.0
    %538 = vmatpush1.msra.mxu0 %v496
    %539 = vmatprep.subr.mxu0 0.0
    %540 = vmatpush1.msra.mxu0 %v494
    %541 = vmatprep.subr.mxu0 0.0
    %542 = vmatpush2.msra.mxu0 0.0
    %543 = vmatprep.subr.mxu0 0.0
    %544 = vmatpush2.msra.mxu0 0.0
    %545 = vmatprep.subr.mxu0 0.0
    %546 = vmatpush2.msra.mxu0 0.0
    %547 = vmatprep.subr.mxu0 0.0
    %548 = vmatpush2.msra.mxu0 0.0
    %549 = vmatprep.subr.mxu0 0.0
    %550 = vmatpush2.msra.mxu0 0.0
    %551 = vmatprep.subr.mxu0 0.0
    %552 = vmatpush2.msra.mxu0 0.0
    %553 = vmatprep.subr.mxu0 0.0
    %554 = vmatpush2.msra.mxu0 0.0
    %555 = vmatprep.subr.mxu0 0.0
    %556 = vmatpush2.msra.mxu0 0.0
    %557 = vmatprep.subr.mxu0 0.0
    %558 = vmatpush2.msra.mxu0 0.0
    %559 = vmatprep.subr.mxu0 0.0
    %560 = vmatpush2.msra.mxu0 0.0
    %561 = vmatprep.subr.mxu0 0.0
    %562 = vmatpush2.msra.mxu0 0.0
    %563 = vmatprep.subr.mxu0 0.0
    %564 = vmatpush2.msra.mxu0 0.0
    %565 = vmatprep.subr.mxu0 0.0
    %566 = vmatpush2.msra.mxu0 0.0
    %567 = vmatprep.subr.mxu0 0.0
    %568 = vmatpush2.msra.mxu0 0.0
    %569 = vmatprep.subr.mxu0 0.0
    %570 = vmatpush2.msra.mxu0 0.0
    %571 = vmatprep.subr.mxu0 0.0
    %572 = vmatpush2.msra.mxu0 0.0
    %573 = vmatprep.mubr.f32.mxu0 0.0
    %574 = vmatmul.mubr.f32.gmra.mxu0 %v410
    %v575 = vpop.f32.mrf.mxu0
    %v576 = vadd.f32 %v507, %v575
    %v577 = vpop.f32.mrf.mxu0
    %578 = vdwg.mxu0
    %v579 = vmul.f32 %v488, %v576
    %581 = vrot.lane.b32.xlu0 %v579, 64
    %v582 = vpop.permute.xlu0 %581
    %v584 = vadd.f32 %v370, %v582
    %v585 = vtanh.pop %v584
    %v586 = vsub.f32 1.0, %v488
    %588 = vrot.lane.b32.xlu0 %v585, 96
    %v589 = vpop.permute.xlu0 %588
    %v591 = vmul.f32 %v586, %v589
    %592 = vrot.lane.b32.xlu0 %v408, 32
    %v593 = vpop.permute.xlu0 %592
    %v595 = vmul.f32 %v488, %v593
    %v596 = vadd.f32 %v591, %v595
    %598 = vrot.lane.b32.xlu0 %v596, 96
    %v599 = vpop.permute.xlu0 %598
    %v600 = vsel %vm278, %v599, 0
    %602 = vmatprep.subr.mxu0 0.0
    %603 = vmatpush1.msra.mxu0 0.0
    %604 = vmatprep.subr.mxu0 0.0
    %605 = vmatpush1.msra.mxu0 0.0
    %606 = vmatprep.subr.mxu0 0.0
    %607 = vmatpush1.msra.mxu0 0.0
    %608 = vmatprep.subr.mxu0 0.0
    %609 = vmatpush1.msra.mxu0 0.0
    %610 = vmatprep.subr.mxu0 0.0
    %611 = vmatpush1.msra.mxu0 0.0
    %612 = vmatprep.subr.mxu0 0.0
    %613 = vmatpush1.msra.mxu0 0.0
    %614 = vmatprep.subr.mxu0 0.0
    %615 = vmatpush1.msra.mxu0 0.0
    %616 = vmatprep.subr.mxu0 0.0
    %617 = vmatpush1.msra.mxu0 0.0
    %618 = vmatprep.subr.mxu0 0.0
    %619 = vmatpush1.msra.mxu0 0.0
    %620 = vmatprep.subr.mxu0 0.0
    %621 = vmatpush1.msra.mxu0 0.0
    %622 = vmatprep.subr.mxu0 0.0
    %623 = vmatpush1.msra.mxu0 0.0
    %624 = vmatprep.subr.mxu0 0.0
    %625 = vmatpush1.msra.mxu0 0.0
    %626 = vmatprep.subr.mxu0 0.0
    %627 = vmatpush1.msra.mxu0 %v273
    %628 = vmatprep.subr.mxu0 0.0
    %629 = vmatpush1.msra.mxu0 %v272
    %630 = vmatprep.subr.mxu0 0.0
    %631 = vmatpush1.msra.mxu0 %v271
    %632 = vmatprep.subr.mxu0 0.0
    %633 = vmatpush1.msra.mxu0 %v270
    %634 = vmatprep.subr.mxu0 0.0
    %635 = vmatpush2.msra.mxu0 0.0
    %636 = vmatprep.subr.mxu0 0.0
    %637 = vmatpush2.msra.mxu0 0.0
    %638 = vmatprep.subr.mxu0 0.0
    %639 = vmatpush2.msra.mxu0 0.0
    %640 = vmatprep.subr.mxu0 0.0
    %641 = vmatpush2.msra.mxu0 0.0
    %642 = vmatprep.subr.mxu0 0.0
    %643 = vmatpush2.msra.mxu0 0.0
    %644 = vmatprep.subr.mxu0 0.0
    %645 = vmatpush2.msra.mxu0 0.0
    %646 = vmatprep.subr.mxu0 0.0
    %647 = vmatpush2.msra.mxu0 0.0
    %648 = vmatprep.subr.mxu0 0.0
    %649 = vmatpush2.msra.mxu0 0.0
    %650 = vmatprep.subr.mxu0 0.0
    %651 = vmatpush2.msra.mxu0 0.0
    %652 = vmatprep.subr.mxu0 0.0
    %653 = vmatpush2.msra.mxu0 0.0
    %654 = vmatprep.subr.mxu0 0.0
    %655 = vmatpush2.msra.mxu0 0.0
    %656 = vmatprep.subr.mxu0 0.0
    %657 = vmatpush2.msra.mxu0 0.0
    %658 = vmatprep.subr.mxu0 0.0
    %659 = vmatpush2.msra.mxu0 0.0
    %660 = vmatprep.subr.mxu0 0.0
    %661 = vmatpush2.msra.mxu0 0.0
    %662 = vmatprep.subr.mxu0 0.0
    %663 = vmatpush2.msra.mxu0 0.0
    %664 = vmatprep.subr.mxu0 0.0
    %665 = vmatpush2.msra.mxu0 0.0
    %666 = vmatprep.mubr.f32.mxu0 0.0
    %667 = vmatmul.mubr.f32.gmra.mxu0 %v600
    %v668 = vpop.f32.mrf.mxu0
    %v669 = vadd.f32 0.0, %v668
    %v670 = vpop.f32.mrf.mxu0
    %671 = vdwg.mxu0
    %v672 = vadd.f32 %v375, %v669
    %v673 = vxor.u32 %v672, 2147483648
    %v674 = vmul.f32 %v673, 1.442695
    %v675 = vpow.pop %v674
    %v676 = vadd.f32 %v675, 1.0
    %v677 = vrcp.pop %v676
    %v678 = vmul.f32 1.0, %v677
    %679 = vmatprep.subr.mxu0 0.0
    %680 = vmatpush1.msra.mxu0 0.0
    %681 = vmatprep.subr.mxu0 0.0
    %682 = vmatpush1.msra.mxu0 0.0
    %683 = vmatprep.subr.mxu0 0.0
    %684 = vmatpush1.msra.mxu0 0.0
    %685 = vmatprep.subr.mxu0 0.0
    %686 = vmatpush1.msra.mxu0 0.0
    %687 = vmatprep.subr.mxu0 0.0
    %688 = vmatpush1.msra.mxu0 0.0
    %689 = vmatprep.subr.mxu0 0.0
    %690 = vmatpush1.msra.mxu0 0.0
    %691 = vmatprep.subr.mxu0 0.0
    %692 = vmatpush1.msra.mxu0 0.0
    %693 = vmatprep.subr.mxu0 0.0
    %694 = vmatpush1.msra.mxu0 0.0
    %695 = vmatprep.subr.mxu0 0.0
    %696 = vmatpush1.msra.mxu0 0.0
    %697 = vmatprep.subr.mxu0 0.0
    %698 = vmatpush1.msra.mxu0 0.0
    %699 = vmatprep.subr.mxu0 0.0
    %700 = vmatpush1.msra.mxu0 0.0
    %701 = vmatprep.subr.mxu0 0.0
    %702 = vmatpush1.msra.mxu0 0.0
    %703 = vmatprep.subr.mxu0 0.0
    %704 = vmatpush1.msra.mxu0 %v500
    %705 = vmatprep.subr.mxu0 0.0
    %706 = vmatpush1.msra.mxu0 %v498
    %707 = vmatprep.subr.mxu0 0.0
    %708 = vmatpush1.msra.mxu0 %v496
    %709 = vmatprep.subr.mxu0 0.0
    %710 = vmatpush1.msra.mxu0 %v494
    %711 = vmatprep.subr.mxu0 0.0
    %712 = vmatpush2.msra.mxu0 0.0
    %713 = vmatprep.subr.mxu0 0.0
    %714 = vmatpush2.msra.mxu0 0.0
    %715 = vmatprep.subr.mxu0 0.0
    %716 = vmatpush2.msra.mxu0 0.0
    %717 = vmatprep.subr.mxu0 0.0
    %718 = vmatpush2.msra.mxu0 0.0
    %719 = vmatprep.subr.mxu0 0.0
    %720 = vmatpush2.msra.mxu0 0.0
    %721 = vmatprep.subr.mxu0 0.0
    %722 = vmatpush2.msra.mxu0 0.0
    %723 = vmatprep.subr.mxu0 0.0
    %724 = vmatpush2.msra.mxu0 0.0
    %725 = vmatprep.subr.mxu0 0.0
    %726 = vmatpush2.msra.mxu0 0.0
    %727 = vmatprep.subr.mxu0 0.0
    %728 = vmatpush2.msra.mxu0 0.0
    %729 = vmatprep.subr.mxu0 0.0
    %730 = vmatpush2.msra.mxu0 0.0
    %731 = vmatprep.subr.mxu0 0.0
    %732 = vmatpush2.msra.mxu0 0.0
    %733 = vmatprep.subr.mxu0 0.0
    %734 = vmatpush2.msra.mxu0 0.0
    %735 = vmatprep.subr.mxu0 0.0
    %736 = vmatpush2.msra.mxu0 0.0
    %737 = vmatprep.subr.mxu0 0.0
    %738 = vmatpush2.msra.mxu0 0.0
    %739 = vmatprep.subr.mxu0 0.0
    %740 = vmatpush2.msra.mxu0 0.0
    %741 = vmatprep.subr.mxu0 0.0
    %742 = vmatpush2.msra.mxu0 0.0
    %743 = vmatprep.mubr.f32.mxu0 0.0
    %744 = vmatmul.mubr.f32.gmra.mxu0 %v600
    %v745 = vpop.f32.mrf.mxu0
    %v746 = vadd.f32 %v507, %v745
    %v747 = vpop.f32.mrf.mxu0
    %748 = vdwg.mxu0
    %v749 = vmul.f32 %v678, %v746
    %751 = vrot.lane.b32.xlu0 %v749, 64
    %v752 = vpop.permute.xlu0 %751
    %v754 = vadd.f32 %v375, %v752
    %v755 = vtanh.pop %v754
    %v756 = vsub.f32 1.0, %v678
    %758 = vrot.lane.b32.xlu0 %v755, 96
    %v759 = vpop.permute.xlu0 %758
    %v761 = vmul.f32 %v756, %v759
    %v762 = vmul.f32 %v678, %v596
    %v763 = vadd.f32 %v761, %v762
    %765 = vrot.lane.b32.xlu0 %v763, 96
    %v766 = vpop.permute.xlu0 %765
    %v767 = vsel %vm278, %v766, 0
    %769 = vmatprep.subr.mxu0 0.0
    %770 = vmatpush1.msra.mxu0 0.0
    %771 = vmatprep.subr.mxu0 0.0
    %772 = vmatpush1.msra.mxu0 0.0
    %773 = vmatprep.subr.mxu0 0.0
    %774 = vmatpush1.msra.mxu0 0.0
    %775 = vmatprep.subr.mxu0 0.0
    %776 = vmatpush1.msra.mxu0 0.0
    %777 = vmatprep.subr.mxu0 0.0
    %778 = vmatpush1.msra.mxu0 0.0
    %779 = vmatprep.subr.mxu0 0.0
    %780 = vmatpush1.msra.mxu0 0.0
    %781 = vmatprep.subr.mxu0 0.0
    %782 = vmatpush1.msra.mxu0 0.0
    %783 = vmatprep.subr.mxu0 0.0
    %784 = vmatpush1.msra.mxu0 0.0
    %785 = vmatprep.subr.mxu0 0.0
    %786 = vmatpush1.msra.mxu0 0.0
    %787 = vmatprep.subr.mxu0 0.0
    %788 = vmatpush1.msra.mxu0 0.0
    %789 = vmatprep.subr.mxu0 0.0
    %790 = vmatpush1.msra.mxu0 0.0
    %791 = vmatprep.subr.mxu0 0.0
    %792 = vmatpush1.msra.mxu0 0.0
    %793 = vmatprep.subr.mxu0 0.0
    %794 = vmatpush1.msra.mxu0 %v273
    %795 = vmatprep.subr.mxu0 0.0
    %796 = vmatpush1.msra.mxu0 %v272
    %797 = vmatprep.subr.mxu0 0.0
    %798 = vmatpush1.msra.mxu0 %v271
    %799 = vmatprep.subr.mxu0 0.0
    %800 = vmatpush1.msra.mxu0 %v270
    %801 = vmatprep.subr.mxu0 0.0
    %802 = vmatpush2.msra.mxu0 0.0
    %803 = vmatprep.subr.mxu0 0.0
    %804 = vmatpush2.msra.mxu0 0.0
    %805 = vmatprep.subr.mxu0 0.0
    %806 = vmatpush2.msra.mxu0 0.0
    %807 = vmatprep.subr.mxu0 0.0
    %808 = vmatpush2.msra.mxu0 0.0
    %809 = vmatprep.subr.mxu0 0.0
    %810 = vmatpush2.msra.mxu0 0.0
    %811 = vmatprep.subr.mxu0 0.0
    %812 = vmatpush2.msra.mxu0 0.0
    %813 = vmatprep.subr.mxu0 0.0
    %814 = vmatpush2.msra.mxu0 0.0
    %815 = vmatprep.subr.mxu0 0.0
    %816 = vmatpush2.msra.mxu0 0.0
    %817 = vmatprep.subr.mxu0 0.0
    %818 = vmatpush2.msra.mxu0 0.0
    %819 = vmatprep.subr.mxu0 0.0
    %820 = vmatpush2.msra.mxu0 0.0
    %821 = vmatprep.subr.mxu0 0.0
    %822 = vmatpush2.msra.mxu0 0.0
    %823 = vmatprep.subr.mxu0 0.0
    %824 = vmatpush2.msra.mxu0 0.0
    %825 = vmatprep.subr.mxu0 0.0
    %826 = vmatpush2.msra.mxu0 0.0
    %827 = vmatprep.subr.mxu0 0.0
    %828 = vmatpush2.msra.mxu0 0.0
    %829 = vmatprep.subr.mxu0 0.0
    %830 = vmatpush2.msra.mxu0 0.0
    %831 = vmatprep.subr.mxu0 0.0
    %832 = vmatpush2.msra.mxu0 0.0
    %833 = vmatprep.mubr.f32.mxu0 0.0
    %834 = vmatmul.mubr.f32.gmra.mxu0 %v767
    %v835 = vpop.f32.mrf.mxu0
    %v836 = vadd.f32 0.0, %v835
    %v837 = vpop.f32.mrf.mxu0
    %838 = vdwg.mxu0
    %v839 = vadd.f32 %v380, %v836
    %v840 = vxor.u32 %v839, 2147483648
    %v841 = vmul.f32 %v840, 1.442695
    %v842 = vpow.pop %v841
    %v843 = vadd.f32 %v842, 1.0
    %v844 = vrcp.pop %v843
    %v845 = vmul.f32 1.0, %v844
    %846 = vmatprep.subr.mxu0 0.0
    %847 = vmatpush1.msra.mxu0 0.0
    %848 = vmatprep.subr.mxu0 0.0
    %849 = vmatpush1.msra.mxu0 0.0
    %850 = vmatprep.subr.mxu0 0.0
    %851 = vmatpush1.msra.mxu0 0.0
    %852 = vmatprep.subr.mxu0 0.0
    %853 = vmatpush1.msra.mxu0 0.0
    %854 = vmatprep.subr.mxu0 0.0
    %855 = vmatpush1.msra.mxu0 0.0
    %856 = vmatprep.subr.mxu0 0.0
    %857 = vmatpush1.msra.mxu0 0.0
    %858 = vmatprep.subr.mxu0 0.0
    %859 = vmatpush1.msra.mxu0 0.0
    %860 = vmatprep.subr.mxu0 0.0
    %861 = vmatpush1.msra.mxu0 0.0
    %862 = vmatprep.subr.mxu0 0.0
    %863 = vmatpush1.msra.mxu0 0.0
    %864 = vmatprep.subr.mxu0 0.0
    %865 = vmatpush1.msra.mxu0 0.0
    %866 = vmatprep.subr.mxu0 0.0
    %867 = vmatpush1.msra.mxu0 0.0
    %868 = vmatprep.subr.mxu0 0.0
    %869 = vmatpush1.msra.mxu0 0.0
    %870 = vmatprep.subr.mxu0 0.0
    %871 = vmatpush1.msra.mxu0 %v500
    %872 = vmatprep.subr.mxu0 0.0
    %873 = vmatpush1.msra.mxu0 %v498
    %874 = vmatprep.subr.mxu0 0.0
    %875 = vmatpush1.msra.mxu0 %v496
    %876 = vmatprep.subr.mxu0 0.0
    %877 = vmatpush1.msra.mxu0 %v494
    %878 = vmatprep.subr.mxu0 0.0
    %879 = vmatpush2.msra.mxu0 0.0
    %880 = vmatprep.subr.mxu0 0.0
    %881 = vmatpush2.msra.mxu0 0.0
    %882 = vmatprep.subr.mxu0 0.0
    %883 = vmatpush2.msra.mxu0 0.0
    %884 = vmatprep.subr.mxu0 0.0
    %885 = vmatpush2.msra.mxu0 0.0
    %886 = vmatprep.subr.mxu0 0.0
    %887 = vmatpush2.msra.mxu0 0.0
    %888 = vmatprep.subr.mxu0 0.0
    %889 = vmatpush2.msra.mxu0 0.0
    %890 = vmatprep.subr.mxu0 0.0
    %891 = vmatpush2.msra.mxu0 0.0
    %892 = vmatprep.subr.mxu0 0.0
    %893 = vmatpush2.msra.mxu0 0.0
    %894 = vmatprep.subr.mxu0 0.0
    %895 = vmatpush2.msra.mxu0 0.0
    %896 = vmatprep.subr.mxu0 0.0
    %897 = vmatpush2.msra.mxu0 0.0
    %898 = vmatprep.subr.mxu0 0.0
    %899 = vmatpush2.msra.mxu0 0.0
    %900 = vmatprep.subr.mxu0 0.0
    %901 = vmatpush2.msra.mxu0 0.0
    %902 = vmatprep.subr.mxu0 0.0
    %903 = vmatpush2.msra.mxu0 0.0
    %904 = vmatprep.subr.mxu0 0.0
    %905 = vmatpush2.msra.mxu0 0.0
    %906 = vmatprep.subr.mxu0 0.0
    %907 = vmatpush2.msra.mxu0 0.0
    %908 = vmatprep.subr.mxu0 0.0
    %909 = vmatpush2.msra.mxu0 0.0
    %910 = vmatprep.mubr.f32.mxu0 0.0
    %911 = vmatmul.mubr.f32.gmra.mxu0 %v767
    %v912 = vpop.f32.mrf.mxu0
    %v913 = vadd.f32 %v507, %v912
    %v914 = vpop.f32.mrf.mxu0
    %915 = vdwg.mxu0
    %v916 = vmul.f32 %v845, %v913
    %918 = vrot.lane.b32.xlu0 %v916, 64
    %v919 = vpop.permute.xlu0 %918
    %v921 = vadd.f32 %v380, %v919
    %v922 = vtanh.pop %v921
    %v923 = vsub.f32 1.0, %v845
    %925 = vrot.lane.b32.xlu0 %v922, 96
    %v926 = vpop.permute.xlu0 %925
    %v928 = vmul.f32 %v923, %v926
    %v929 = vmul.f32 %v845, %v763
    %v930 = vadd.f32 %v928, %v929
    %932 = vrot.lane.b32.xlu0 %v930, 96
    %v933 = vpop.permute.xlu0 %932
    %v934 = vsel %vm278, %v933, 0
    %936 = vmatprep.subr.mxu0 0.0
    %937 = vmatpush1.msra.mxu0 0.0
    %938 = vmatprep.subr.mxu0 0.0
    %939 = vmatpush1.msra.mxu0 0.0
    %940 = vmatprep.subr.mxu0 0.0
    %941 = vmatpush1.msra.mxu0 0.0
    %942 = vmatprep.subr.mxu0 0.0
    %943 = vmatpush1.msra.mxu0 0.0
    %944 = vmatprep.subr.mxu0 0.0
    %945 = vmatpush1.msra.mxu0 0.0
    %946 = vmatprep.subr.mxu0 0.0
    %947 = vmatpush1.msra.mxu0 0.0
    %948 = vmatprep.subr.mxu0 0.0
    %949 = vmatpush1.msra.mxu0 0.0
    %950 = vmatprep.subr.mxu0 0.0
    %951 = vmatpush1.msra.mxu0 0.0
    %952 = vmatprep.subr.mxu0 0.0
    %953 = vmatpush1.msra.mxu0 0.0
    %954 = vmatprep.subr.mxu0 0.0
    %955 = vmatpush1.msra.mxu0 0.0
    %956 = vmatprep.subr.mxu0 0.0
    %957 = vmatpush1.msra.mxu0 0.0
    %958 = vmatprep.subr.mxu0 0.0
    %959 = vmatpush1.msra.mxu0 0.0
    %960 = vmatprep.subr.mxu0 0.0
    %961 = vmatpush1.msra.mxu0 %v273
    %962 = vmatprep.subr.mxu0 0.0
    %963 = vmatpush1.msra.mxu0 %v272
    %964 = vmatprep.subr.mxu0 0.0
    %965 = vmatpush1.msra.mxu0 %v271
    %966 = vmatprep.subr.mxu0 0.0
    %967 = vmatpush1.msra.mxu0 %v270
    %968 = vmatprep.subr.mxu0 0.0
    %969 = vmatpush2.msra.mxu0 0.0
    %970 = vmatprep.subr.mxu0 0.0
    %971 = vmatpush2.msra.mxu0 0.0
    %972 = vmatprep.subr.mxu0 0.0
    %973 = vmatpush2.msra.mxu0 0.0
    %974 = vmatprep.subr.mxu0 0.0
    %975 = vmatpush2.msra.mxu0 0.0
    %976 = vmatprep.subr.mxu0 0.0
    %977 = vmatpush2.msra.mxu0 0.0
    %978 = vmatprep.subr.mxu0 0.0
    %979 = vmatpush2.msra.mxu0 0.0
    %980 = vmatprep.subr.mxu0 0.0
    %981 = vmatpush2.msra.mxu0 0.0
    %982 = vmatprep.subr.mxu0 0.0
    %983 = vmatpush2.msra.mxu0 0.0
    %984 = vmatprep.subr.mxu0 0.0
    %985 = vmatpush2.msra.mxu0 0.0
    %986 = vmatprep.subr.mxu0 0.0
    %987 = vmatpush2.msra.mxu0 0.0
    %988 = vmatprep.subr.mxu0 0.0
    %989 = vmatpush2.msra.mxu0 0.0
    %990 = vmatprep.subr.mxu0 0.0
    %991 = vmatpush2.msra.mxu0 0.0
    %992 = vmatprep.subr.mxu0 0.0
    %993 = vmatpush2.msra.mxu0 0.0
    %994 = vmatprep.subr.mxu0 0.0
    %995 = vmatpush2.msra.mxu0 0.0
    %996 = vmatprep.subr.mxu0 0.0
    %997 = vmatpush2.msra.mxu0 0.0
    %998 = vmatprep.subr.mxu0 0.0
    %999 = vmatpush2.msra.mxu0 0.0
    %1000 = vmatprep.mubr.f32.mxu0 0.0
    %1001 = vmatmul.mubr.f32.gmra.mxu0 %v934
    %v1002 = vpop.f32.mrf.mxu0
    %v1003 = vadd.f32 0.0, %v1002
    %v1004 = vpop.f32.mrf.mxu0
    %1005 = vdwg.mxu0
    %v1006 = vadd.f32 %v385, %v1003
    %v1007 = vxor.u32 %v1006, 2147483648
    %v1008 = vmul.f32 %v1007, 1.442695
    %v1009 = vpow.pop %v1008
    %v1010 = vadd.f32 %v1009, 1.0
    %v1011 = vrcp.pop %v1010
    %v1012 = vmul.f32 1.0, %v1011
    %1013 = vmatprep.subr.mxu0 0.0
    %1014 = vmatpush1.msra.mxu0 0.0
    %1015 = vmatprep.subr.mxu0 0.0
    %1016 = vmatpush1.msra.mxu0 0.0
    %1017 = vmatprep.subr.mxu0 0.0
    %1018 = vmatpush1.msra.mxu0 0.0
    %1019 = vmatprep.subr.mxu0 0.0
    %1020 = vmatpush1.msra.mxu0 0.0
    %1021 = vmatprep.subr.mxu0 0.0
    %1022 = vmatpush1.msra.mxu0 0.0
    %1023 = vmatprep.subr.mxu0 0.0
    %1024 = vmatpush1.msra.mxu0 0.0
    %1025 = vmatprep.subr.mxu0 0.0
    %1026 = vmatpush1.msra.mxu0 0.0
    %1027 = vmatprep.subr.mxu0 0.0
    %1028 = vmatpush1.msra.mxu0 0.0
    %1029 = vmatprep.subr.mxu0 0.0
    %1030 = vmatpush1.msra.mxu0 0.0
    %1031 = vmatprep.subr.mxu0 0.0
    %1032 = vmatpush1.msra.mxu0 0.0
    %1033 = vmatprep.subr.mxu0 0.0
    %1034 = vmatpush1.msra.mxu0 0.0
    %1035 = vmatprep.subr.mxu0 0.0
    %1036 = vmatpush1.msra.mxu0 0.0
    %1037 = vmatprep.subr.mxu0 0.0
    %1038 = vmatpush1.msra.mxu0 %v500
    %1039 = vmatprep.subr.mxu0 0.0
    %1040 = vmatpush1.msra.mxu0 %v498
    %1041 = vmatprep.subr.mxu0 0.0
    %1042 = vmatpush1.msra.mxu0 %v496
    %1043 = vmatprep.subr.mxu0 0.0
    %1044 = vmatpush1.msra.mxu0 %v494
    %1045 = vmatprep.subr.mxu0 0.0
    %1046 = vmatpush2.msra.mxu0 0.0
    %1047 = vmatprep.subr.mxu0 0.0
    %1048 = vmatpush2.msra.mxu0 0.0
    %1049 = vmatprep.subr.mxu0 0.0
    %1050 = vmatpush2.msra.mxu0 0.0
    %1051 = vmatprep.subr.mxu0 0.0
    %1052 = vmatpush2.msra.mxu0 0.0
    %1053 = vmatprep.subr.mxu0 0.0
    %1054 = vmatpush2.msra.mxu0 0.0
    %1055 = vmatprep.subr.mxu0 0.0
    %1056 = vmatpush2.msra.mxu0 0.0
    %1057 = vmatprep.subr.mxu0 0.0
    %1058 = vmatpush2.msra.mxu0 0.0
    %1059 = vmatprep.subr.mxu0 0.0
    %1060 = vmatpush2.msra.mxu0 0.0
    %1061 = vmatprep.subr.mxu0 0.0
    %1062 = vmatpush2.msra.mxu0 0.0
    %1063 = vmatprep.subr.mxu0 0.0
    %1064 = vmatpush2.msra.mxu0 0.0
    %1065 = vmatprep.subr.mxu0 0.0
    %1066 = vmatpush2.msra.mxu0 0.0
    %1067 = vmatprep.subr.mxu0 0.0
    %1068 = vmatpush2.msra.mxu0 0.0
    %1069 = vmatprep.subr.mxu0 0.0
    %1070 = vmatpush2.msra.mxu0 0.0
    %1071 = vmatprep.subr.mxu0 0.0
    %1072 = vmatpush2.msra.mxu0 0.0
    %1073 = vmatprep.subr.mxu0 0.0
    %1074 = vmatpush2.msra.mxu0 0.0
    %1075 = vmatprep.subr.mxu0 0.0
    %1076 = vmatpush2.msra.mxu0 0.0
    %1077 = vmatprep.mubr.f32.mxu0 0.0
    %1078 = vmatmul.mubr.f32.gmra.mxu0 %v934
    %v1079 = vpop.f32.mrf.mxu0
    %v1080 = vadd.f32 %v507, %v1079
    %v1081 = vpop.f32.mrf.mxu0
    %1082 = vdwg.mxu0
    %v1083 = vmul.f32 %v1012, %v1080
    %1085 = vrot.lane.b32.xlu0 %v1083, 64
    %v1086 = vpop.permute.xlu0 %1085
    %v1088 = vadd.f32 %v385, %v1086
    %v1089 = vtanh.pop %v1088
    %v1090 = vsub.f32 1.0, %v1012
    %1092 = vrot.lane.b32.xlu0 %v1089, 96
    %v1093 = vpop.permute.xlu0 %1092
    %v1095 = vmul.f32 %v1090, %v1093
    %v1096 = vmul.f32 %v1012, %v930
    %v1097 = vadd.f32 %v1095, %v1096
    %1099 = vrot.lane.b32.xlu0 %v1097, 96
    %v1100 = vpop.permute.xlu0 %1099
    %v1101 = vsel %vm278, %v1100, 0
    %1103 = vmatprep.subr.mxu0 0.0
    %1104 = vmatpush1.msra.mxu0 0.0
    %1105 = vmatprep.subr.mxu0 0.0
    %1106 = vmatpush1.msra.mxu0 0.0
    %1107 = vmatprep.subr.mxu0 0.0
    %1108 = vmatpush1.msra.mxu0 0.0
    %1109 = vmatprep.subr.mxu0 0.0
    %1110 = vmatpush1.msra.mxu0 0.0
    %1111 = vmatprep.subr.mxu0 0.0
    %1112 = vmatpush1.msra.mxu0 0.0
    %1113 = vmatprep.subr.mxu0 0.0
    %1114 = vmatpush1.msra.mxu0 0.0
    %1115 = vmatprep.subr.mxu0 0.0
    %1116 = vmatpush1.msra.mxu0 0.0
    %1117 = vmatprep.subr.mxu0 0.0
    %1118 = vmatpush1.msra.mxu0 0.0
    %1119 = vmatprep.subr.mxu0 0.0
    %1120 = vmatpush1.msra.mxu0 0.0
    %1121 = vmatprep.subr.mxu0 0.0
    %1122 = vmatpush1.msra.mxu0 0.0
    %1123 = vmatprep.subr.mxu0 0.0
    %1124 = vmatpush1.msra.mxu0 0.0
    %1125 = vmatprep.subr.mxu0 0.0
    %1126 = vmatpush1.msra.mxu0 0.0
    %1127 = vmatprep.subr.mxu0 0.0
    %1128 = vmatpush1.msra.mxu0 %v273
    %1129 = vmatprep.subr.mxu0 0.0
    %1130 = vmatpush1.msra.mxu0 %v272
    %1131 = vmatprep.subr.mxu0 0.0
    %1132 = vmatpush1.msra.mxu0 %v271
    %1133 = vmatprep.subr.mxu0 0.0
    %1134 = vmatpush1.msra.mxu0 %v270
    %1135 = vmatprep.subr.mxu0 0.0
    %1136 = vmatpush2.msra.mxu0 0.0
    %1137 = vmatprep.subr.mxu0 0.0
    %1138 = vmatpush2.msra.mxu0 0.0
    %1139 = vmatprep.subr.mxu0 0.0
    %1140 = vmatpush2.msra.mxu0 0.0
    %1141 = vmatprep.subr.mxu0 0.0
    %1142 = vmatpush2.msra.mxu0 0.0
    %1143 = vmatprep.subr.mxu0 0.0
    %1144 = vmatpush2.msra.mxu0 0.0
    %1145 = vmatprep.subr.mxu0 0.0
    %1146 = vmatpush2.msra.mxu0 0.0
    %1147 = vmatprep.subr.mxu0 0.0
    %1148 = vmatpush2.msra.mxu0 0.0
    %1149 = vmatprep.subr.mxu0 0.0
    %1150 = vmatpush2.msra.mxu0 0.0
    %1151 = vmatprep.subr.mxu0 0.0
    %1152 = vmatpush2.msra.mxu0 0.0
    %1153 = vmatprep.subr.mxu0 0.0
    %1154 = vmatpush2.msra.mxu0 0.0
    %1155 = vmatprep.subr.mxu0 0.0
    %1156 = vmatpush2.msra.mxu0 0.0
    %1157 = vmatprep.subr.mxu0 0.0
    %1158 = vmatpush2.msra.mxu0 0.0
    %1159 = vmatprep.subr.mxu0 0.0
    %1160 = vmatpush2.msra.mxu0 0.0
    %1161 = vmatprep.subr.mxu0 0.0
    %1162 = vmatpush2.msra.mxu0 0.0
    %1163 = vmatprep.subr.mxu0 0.0
    %1164 = vmatpush2.msra.mxu0 0.0
    %1165 = vmatprep.subr.mxu0 0.0
    %1166 = vmatpush2.msra.mxu0 0.0
    %1167 = vmatprep.mubr.f32.mxu0 0.0
    %1168 = vmatmul.mubr.f32.gmra.mxu0 %v1101
    %v1169 = vpop.f32.mrf.mxu0
    %v1170 = vadd.f32 0.0, %v1169
    %v1171 = vpop.f32.mrf.mxu0
    %1172 = vdwg.mxu0
    %v1173 = vadd.f32 %v390, %v1170
    %v1174 = vxor.u32 %v1173, 2147483648
    %v1175 = vmul.f32 %v1174, 1.442695
    %v1176 = vpow.pop %v1175
    %v1177 = vadd.f32 %v1176, 1.0
    %v1178 = vrcp.pop %v1177
    %v1179 = vmul.f32 1.0, %v1178
    %1180 = vmatprep.subr.mxu0 0.0
    %1181 = vmatpush1.msra.mxu0 0.0
    %1182 = vmatprep.subr.mxu0 0.0
    %1183 = vmatpush1.msra.mxu0 0.0
    %1184 = vmatprep.subr.mxu0 0.0
    %1185 = vmatpush1.msra.mxu0 0.0
    %1186 = vmatprep.subr.mxu0 0.0
    %1187 = vmatpush1.msra.mxu0 0.0
    %1188 = vmatprep.subr.mxu0 0.0
    %1189 = vmatpush1.msra.mxu0 0.0
    %1190 = vmatprep.subr.mxu0 0.0
    %1191 = vmatpush1.msra.mxu0 0.0
    %1192 = vmatprep.subr.mxu0 0.0
    %1193 = vmatpush1.msra.mxu0 0.0
    %1194 = vmatprep.subr.mxu0 0.0
    %1195 = vmatpush1.msra.mxu0 0.0
    %1196 = vmatprep.subr.mxu0 0.0
    %1197 = vmatpush1.msra.mxu0 0.0
    %1198 = vmatprep.subr.mxu0 0.0
    %1199 = vmatpush1.msra.mxu0 0.0
    %1200 = vmatprep.subr.mxu0 0.0
    %1201 = vmatpush1.msra.mxu0 0.0
    %1202 = vmatprep.subr.mxu0 0.0
    %1203 = vmatpush1.msra.mxu0 0.0
    %1204 = vmatprep.subr.mxu0 0.0
    %1205 = vmatpush1.msra.mxu0 %v500
    %1206 = vmatprep.subr.mxu0 0.0
    %1207 = vmatpush1.msra.mxu0 %v498
    %1208 = vmatprep.subr.mxu0 0.0
    %1209 = vmatpush1.msra.mxu0 %v496
    %1210 = vmatprep.subr.mxu0 0.0
    %1211 = vmatpush1.msra.mxu0 %v494
    %1212 = vmatprep.subr.mxu0 0.0
    %1213 = vmatpush2.msra.mxu0 0.0
    %1214 = vmatprep.subr.mxu0 0.0
    %1215 = vmatpush2.msra.mxu0 0.0
    %1216 = vmatprep.subr.mxu0 0.0
    %1217 = vmatpush2.msra.mxu0 0.0
    %1218 = vmatprep.subr.mxu0 0.0
    %1219 = vmatpush2.msra.mxu0 0.0
    %1220 = vmatprep.subr.mxu0 0.0
    %1221 = vmatpush2.msra.mxu0 0.0
    %1222 = vmatprep.subr.mxu0 0.0
    %1223 = vmatpush2.msra.mxu0 0.0
    %1224 = vmatprep.subr.mxu0 0.0
    %1225 = vmatpush2.msra.mxu0 0.0
    %1226 = vmatprep.subr.mxu0 0.0
    %1227 = vmatpush2.msra.mxu0 0.0
    %1228 = vmatprep.subr.mxu0 0.0
    %1229 = vmatpush2.msra.mxu0 0.0
    %1230 = vmatprep.subr.mxu0 0.0
    %1231 = vmatpush2.msra.mxu0 0.0
    %1232 = vmatprep.subr.mxu0 0.0
    %1233 = vmatpush2.msra.mxu0 0.0
    %1234 = vmatprep.subr.mxu0 0.0
    %1235 = vmatpush2.msra.mxu0 0.0
    %1236 = vmatprep.subr.mxu0 0.0
    %1237 = vmatpush2.msra.mxu0 0.0
    %1238 = vmatprep.subr.mxu0 0.0
    %1239 = vmatpush2.msra.mxu0 0.0
    %1240 = vmatprep.subr.mxu0 0.0
    %1241 = vmatpush2.msra.mxu0 0.0
    %1242 = vmatprep.subr.mxu0 0.0
    %1243 = vmatpush2.msra.mxu0 0.0
    %1244 = vmatprep.mubr.f32.mxu0 0.0
    %1245 = vmatmul.mubr.f32.gmra.mxu0 %v1101
    %v1246 = vpop.f32.mrf.mxu0
    %v1247 = vadd.f32 %v507, %v1246
    %v1248 = vpop.f32.mrf.mxu0
    %1249 = vdwg.mxu0
    %v1250 = vmul.f32 %v1179, %v1247
    %1252 = vrot.lane.b32.xlu0 %v1250, 64
    %v1253 = vpop.permute.xlu0 %1252
    %v1255 = vadd.f32 %v390, %v1253
    %v1256 = vtanh.pop %v1255
    %v1257 = vsub.f32 1.0, %v1179
    %1259 = vrot.lane.b32.xlu0 %v1256, 96
    %v1260 = vpop.permute.xlu0 %1259
    %v1262 = vmul.f32 %v1257, %v1260
    %v1263 = vmul.f32 %v1179, %v1097
    %v1264 = vadd.f32 %v1262, %v1263
    %1266 = vrot.lane.b32.xlu0 %v1264, 96
    %v1267 = vpop.permute.xlu0 %1266
    %v1268 = vsel %vm278, %v1267, 0
    %1270 = vmatprep.subr.mxu0 0.0
    %1271 = vmatpush1.msra.mxu0 0.0
    %1272 = vmatprep.subr.mxu0 0.0
    %1273 = vmatpush1.msra.mxu0 0.0
    %1274 = vmatprep.subr.mxu0 0.0
    %1275 = vmatpush1.msra.mxu0 0.0
    %1276 = vmatprep.subr.mxu0 0.0
    %1277 = vmatpush1.msra.mxu0 0.0
    %1278 = vmatprep.subr.mxu0 0.0
    %1279 = vmatpush1.msra.mxu0 0.0
    %1280 = vmatprep.subr.mxu0 0.0
    %1281 = vmatpush1.msra.mxu0 0.0
    %1282 = vmatprep.subr.mxu0 0.0
    %1283 = vmatpush1.msra.mxu0 0.0
    %1284 = vmatprep.subr.mxu0 0.0
    %1285 = vmatpush1.msra.mxu0 0.0
    %1286 = vmatprep.subr.mxu0 0.0
    %1287 = vmatpush1.msra.mxu0 0.0
    %1288 = vmatprep.subr.mxu0 0.0
    %1289 = vmatpush1.msra.mxu0 0.0
    %1290 = vmatprep.subr.mxu0 0.0
    %1291 = vmatpush1.msra.mxu0 0.0
    %1292 = vmatprep.subr.mxu0 0.0
    %1293 = vmatpush1.msra.mxu0 0.0
    %1294 = vmatprep.subr.mxu0 0.0
    %1295 = vmatpush1.msra.mxu0 %v273
    %1296 = vmatprep.subr.mxu0 0.0
    %1297 = vmatpush1.msra.mxu0 %v272
    %1298 = vmatprep.subr.mxu0 0.0
    %1299 = vmatpush1.msra.mxu0 %v271
    %1300 = vmatprep.subr.mxu0 0.0
    %1301 = vmatpush1.msra.mxu0 %v270
    %1302 = vmatprep.subr.mxu0 0.0
    %1303 = vmatpush2.msra.mxu0 0.0
    %1304 = vmatprep.subr.mxu0 0.0
    %1305 = vmatpush2.msra.mxu0 0.0
    %1306 = vmatprep.subr.mxu0 0.0
    %1307 = vmatpush2.msra.mxu0 0.0
    %1308 = vmatprep.subr.mxu0 0.0
    %1309 = vmatpush2.msra.mxu0 0.0
    %1310 = vmatprep.subr.mxu0 0.0
    %1311 = vmatpush2.msra.mxu0 0.0
    %1312 = vmatprep.subr.mxu0 0.0
    %1313 = vmatpush2.msra.mxu0 0.0
    %1314 = vmatprep.subr.mxu0 0.0
    %1315 = vmatpush2.msra.mxu0 0.0
    %1316 = vmatprep.subr.mxu0 0.0
    %1317 = vmatpush2.msra.mxu0 0.0
    %1318 = vmatprep.subr.mxu0 0.0
    %1319 = vmatpush2.msra.mxu0 0.0
    %1320 = vmatprep.subr.mxu0 0.0
    %1321 = vmatpush2.msra.mxu0 0.0
    %1322 = vmatprep.subr.mxu0 0.0
    %1323 = vmatpush2.msra.mxu0 0.0
    %1324 = vmatprep.subr.mxu0 0.0
    %1325 = vmatpush2.msra.mxu0 0.0
    %1326 = vmatprep.subr.mxu0 0.0
    %1327 = vmatpush2.msra.mxu0 0.0
    %1328 = vmatprep.subr.mxu0 0.0
    %1329 = vmatpush2.msra.mxu0 0.0
    %1330 = vmatprep.subr.mxu0 0.0
    %1331 = vmatpush2.msra.mxu0 0.0
    %1332 = vmatprep.subr.mxu0 0.0
    %1333 = vmatpush2.msra.mxu0 0.0
    %1334 = vmatprep.mubr.f32.mxu0 0.0
    %1335 = vmatmul.mubr.f32.gmra.mxu0 %v1268
    %v1336 = vpop.f32.mrf.mxu0
    %v1337 = vadd.f32 0.0, %v1336
    %v1338 = vpop.f32.mrf.mxu0
    %1339 = vdwg.mxu0
    %v1340 = vadd.f32 %v395, %v1337
    %v1341 = vxor.u32 %v1340, 2147483648
    %v1342 = vmul.f32 %v1341, 1.442695
    %v1343 = vpow.pop %v1342
    %v1344 = vadd.f32 %v1343, 1.0
    %v1345 = vrcp.pop %v1344
    %v1346 = vmul.f32 1.0, %v1345
    %1347 = vmatprep.subr.mxu0 0.0
    %1348 = vmatpush1.msra.mxu0 0.0
    %1349 = vmatprep.subr.mxu0 0.0
    %1350 = vmatpush1.msra.mxu0 0.0
    %1351 = vmatprep.subr.mxu0 0.0
    %1352 = vmatpush1.msra.mxu0 0.0
    %1353 = vmatprep.subr.mxu0 0.0
    %1354 = vmatpush1.msra.mxu0 0.0
    %1355 = vmatprep.subr.mxu0 0.0
    %1356 = vmatpush1.msra.mxu0 0.0
    %1357 = vmatprep.subr.mxu0 0.0
    %1358 = vmatpush1.msra.mxu0 0.0
    %1359 = vmatprep.subr.mxu0 0.0
    %1360 = vmatpush1.msra.mxu0 0.0
    %1361 = vmatprep.subr.mxu0 0.0
    %1362 = vmatpush1.msra.mxu0 0.0
    %1363 = vmatprep.subr.mxu0 0.0
    %1364 = vmatpush1.msra.mxu0 0.0
    %1365 = vmatprep.subr.mxu0 0.0
    %1366 = vmatpush1.msra.mxu0 0.0
    %1367 = vmatprep.subr.mxu0 0.0
    %1368 = vmatpush1.msra.mxu0 0.0
    %1369 = vmatprep.subr.mxu0 0.0
    %1370 = vmatpush1.msra.mxu0 0.0
    %1371 = vmatprep.subr.mxu0 0.0
    %1372 = vmatpush1.msra.mxu0 %v500
    %1373 = vmatprep.subr.mxu0 0.0
    %1374 = vmatpush1.msra.mxu0 %v498
    %1375 = vmatprep.subr.mxu0 0.0
    %1376 = vmatpush1.msra.mxu0 %v496
    %1377 = vmatprep.subr.mxu0 0.0
    %1378 = vmatpush1.msra.mxu0 %v494
    %1379 = vmatprep.subr.mxu0 0.0
    %1380 = vmatpush2.msra.mxu0 0.0
    %1381 = vmatprep.subr.mxu0 0.0
    %1382 = vmatpush2.msra.mxu0 0.0
    %1383 = vmatprep.subr.mxu0 0.0
    %1384 = vmatpush2.msra.mxu0 0.0
    %1385 = vmatprep.subr.mxu0 0.0
    %1386 = vmatpush2.msra.mxu0 0.0
    %1387 = vmatprep.subr.mxu0 0.0
    %1388 = vmatpush2.msra.mxu0 0.0
    %1389 = vmatprep.subr.mxu0 0.0
    %1390 = vmatpush2.msra.mxu0 0.0
    %1391 = vmatprep.subr.mxu0 0.0
    %1392 = vmatpush2.msra.mxu0 0.0
    %1393 = vmatprep.subr.mxu0 0.0
    %1394 = vmatpush2.msra.mxu0 0.0
    %1395 = vmatprep.subr.mxu0 0.0
    %1396 = vmatpush2.msra.mxu0 0.0
    %1397 = vmatprep.subr.mxu0 0.0
    %1398 = vmatpush2.msra.mxu0 0.0
    %1399 = vmatprep.subr.mxu0 0.0
    %1400 = vmatpush2.msra.mxu0 0.0
    %1401 = vmatprep.subr.mxu0 0.0
    %1402 = vmatpush2.msra.mxu0 0.0
    %1403 = vmatprep.subr.mxu0 0.0
    %1404 = vmatpush2.msra.mxu0 0.0
    %1405 = vmatprep.subr.mxu0 0.0
    %1406 = vmatpush2.msra.mxu0 0.0
    %1407 = vmatprep.subr.mxu0 0.0
    %1408 = vmatpush2.msra.mxu0 0.0
    %1409 = vmatprep.subr.mxu0 0.0
    %1410 = vmatpush2.msra.mxu0 0.0
    %1411 = vmatprep.mubr.f32.mxu0 0.0
    %1412 = vmatmul.mubr.f32.gmra.mxu0 %v1268
    %v1413 = vpop.f32.mrf.mxu0
    %v1414 = vadd.f32 %v507, %v1413
    %v1415 = vpop.f32.mrf.mxu0
    %1416 = vdwg.mxu0
    %v1417 = vmul.f32 %v1346, %v1414
    %1419 = vrot.lane.b32.xlu0 %v1417, 64
    %v1420 = vpop.permute.xlu0 %1419
    %v1422 = vadd.f32 %v395, %v1420
    %v1423 = vtanh.pop %v1422
    %v1424 = vsub.f32 1.0, %v1346
    %1426 = vrot.lane.b32.xlu0 %v1423, 96
    %v1427 = vpop.permute.xlu0 %1426
    %v1429 = vmul.f32 %v1424, %v1427
    %v1430 = vmul.f32 %v1346, %v1264
    %v1431 = vadd.f32 %v1429, %v1430
    %1433 = vrot.lane.b32.xlu0 %v1431, 96
    %v1434 = vpop.permute.xlu0 %1433
    %v1435 = vsel %vm278, %v1434, 0
    %1437 = vmatprep.subr.mxu0 0.0
    %1438 = vmatpush1.msra.mxu0 0.0
    %1439 = vmatprep.subr.mxu0 0.0
    %1440 = vmatpush1.msra.mxu0 0.0
    %1441 = vmatprep.subr.mxu0 0.0
    %1442 = vmatpush1.msra.mxu0 0.0
    %1443 = vmatprep.subr.mxu0 0.0
    %1444 = vmatpush1.msra.mxu0 0.0
    %1445 = vmatprep.subr.mxu0 0.0
    %1446 = vmatpush1.msra.mxu0 0.0
    %1447 = vmatprep.subr.mxu0 0.0
    %1448 = vmatpush1.msra.mxu0 0.0
    %1449 = vmatprep.subr.mxu0 0.0
    %1450 = vmatpush1.msra.mxu0 0.0
    %1451 = vmatprep.subr.mxu0 0.0
    %1452 = vmatpush1.msra.mxu0 0.0
    %1453 = vmatprep.subr.mxu0 0.0
    %1454 = vmatpush1.msra.mxu0 0.0
    %1455 = vmatprep.subr.mxu0 0.0
    %1456 = vmatpush1.msra.mxu0 0.0
    %1457 = vmatprep.subr.mxu0 0.0
    %1458 = vmatpush1.msra.mxu0 0.0
    %1459 = vmatprep.subr.mxu0 0.0
    %1460 = vmatpush1.msra.mxu0 0.0
    %1461 = vmatprep.subr.mxu0 0.0
    %1462 = vmatpush1.msra.mxu0 %v273
    %1463 = vmatprep.subr.mxu0 0.0
    %1464 = vmatpush1.msra.mxu0 %v272
    %1465 = vmatprep.subr.mxu0 0.0
    %1466 = vmatpush1.msra.mxu0 %v271
    %1467 = vmatprep.subr.mxu0 0.0
    %1468 = vmatpush1.msra.mxu0 %v270
    %1469 = vmatprep.subr.mxu0 0.0
    %1470 = vmatpush2.msra.mxu0 0.0
    %1471 = vmatprep.subr.mxu0 0.0
    %1472 = vmatpush2.msra.mxu0 0.0
    %1473 = vmatprep.subr.mxu0 0.0
    %1474 = vmatpush2.msra.mxu0 0.0
    %1475 = vmatprep.subr.mxu0 0.0
    %1476 = vmatpush2.msra.mxu0 0.0
    %1477 = vmatprep.subr.mxu0 0.0
    %1478 = vmatpush2.msra.mxu0 0.0
    %1479 = vmatprep.subr.mxu0 0.0
    %1480 = vmatpush2.msra.mxu0 0.0
    %1481 = vmatprep.subr.mxu0 0.0
    %1482 = vmatpush2.msra.mxu0 0.0
    %1483 = vmatprep.subr.mxu0 0.0
    %1484 = vmatpush2.msra.mxu0 0.0
    %1485 = vmatprep.subr.mxu0 0.0
    %1486 = vmatpush2.msra.mxu0 0.0
    %1487 = vmatprep.subr.mxu0 0.0
    %1488 = vmatpush2.msra.mxu0 0.0
    %1489 = vmatprep.subr.mxu0 0.0
    %1490 = vmatpush2.msra.mxu0 0.0
    %1491 = vmatprep.subr.mxu0 0.0
    %1492 = vmatpush2.msra.mxu0 0.0
    %1493 = vmatprep.subr.mxu0 0.0
    %1494 = vmatpush2.msra.mxu0 0.0
    %1495 = vmatprep.subr.mxu0 0.0
    %1496 = vmatpush2.msra.mxu0 0.0
    %1497 = vmatprep.subr.mxu0 0.0
    %1498 = vmatpush2.msra.mxu0 0.0
    %1499 = vmatprep.subr.mxu0 0.0
    %1500 = vmatpush2.msra.mxu0 0.0
    %1501 = vmatprep.mubr.f32.mxu0 0.0
    %1502 = vmatmul.mubr.f32.gmra.mxu0 %v1435
    %v1503 = vpop.f32.mrf.mxu0
    %v1504 = vadd.f32 0.0, %v1503
    %v1505 = vpop.f32.mrf.mxu0
    %1506 = vdwg.mxu0
    %v1507 = vadd.f32 %v400, %v1504
    %v1508 = vxor.u32 %v1507, 2147483648
    %v1509 = vmul.f32 %v1508, 1.442695
    %v1510 = vpow.pop %v1509
    %v1511 = vadd.f32 %v1510, 1.0
    %v1512 = vrcp.pop %v1511
    %v1513 = vmul.f32 1.0, %v1512
    %1514 = vmatprep.subr.mxu0 0.0
    %1515 = vmatpush1.msra.mxu0 0.0
    %1516 = vmatprep.subr.mxu0 0.0
    %1517 = vmatpush1.msra.mxu0 0.0
    %1518 = vmatprep.subr.mxu0 0.0
    %1519 = vmatpush1.msra.mxu0 0.0
    %1520 = vmatprep.subr.mxu0 0.0
    %1521 = vmatpush1.msra.mxu0 0.0
    %1522 = vmatprep.subr.mxu0 0.0
    %1523 = vmatpush1.msra.mxu0 0.0
    %1524 = vmatprep.subr.mxu0 0.0
    %1525 = vmatpush1.msra.mxu0 0.0
    %1526 = vmatprep.subr.mxu0 0.0
    %1527 = vmatpush1.msra.mxu0 0.0
    %1528 = vmatprep.subr.mxu0 0.0
    %1529 = vmatpush1.msra.mxu0 0.0
    %1530 = vmatprep.subr.mxu0 0.0
    %1531 = vmatpush1.msra.mxu0 0.0
    %1532 = vmatprep.subr.mxu0 0.0
    %1533 = vmatpush1.msra.mxu0 0.0
    %1534 = vmatprep.subr.mxu0 0.0
    %1535 = vmatpush1.msra.mxu0 0.0
    %1536 = vmatprep.subr.mxu0 0.0
    %1537 = vmatpush1.msra.mxu0 0.0
    %1538 = vmatprep.subr.mxu0 0.0
    %1539 = vmatpush1.msra.mxu0 %v500
    %1540 = vmatprep.subr.mxu0 0.0
    %1541 = vmatpush1.msra.mxu0 %v498
    %1542 = vmatprep.subr.mxu0 0.0
    %1543 = vmatpush1.msra.mxu0 %v496
    %1544 = vmatprep.subr.mxu0 0.0
    %1545 = vmatpush1.msra.mxu0 %v494
    %1546 = vmatprep.subr.mxu0 0.0
    %1547 = vmatpush2.msra.mxu0 0.0
    %1548 = vmatprep.subr.mxu0 0.0
    %1549 = vmatpush2.msra.mxu0 0.0
    %1550 = vmatprep.subr.mxu0 0.0
    %1551 = vmatpush2.msra.mxu0 0.0
    %1552 = vmatprep.subr.mxu0 0.0
    %1553 = vmatpush2.msra.mxu0 0.0
    %1554 = vmatprep.subr.mxu0 0.0
    %1555 = vmatpush2.msra.mxu0 0.0
    %1556 = vmatprep.subr.mxu0 0.0
    %1557 = vmatpush2.msra.mxu0 0.0
    %1558 = vmatprep.subr.mxu0 0.0
    %1559 = vmatpush2.msra.mxu0 0.0
    %1560 = vmatprep.subr.mxu0 0.0
    %1561 = vmatpush2.msra.mxu0 0.0
    %1562 = vmatprep.subr.mxu0 0.0
    %1563 = vmatpush2.msra.mxu0 0.0
    %1564 = vmatprep.subr.mxu0 0.0
    %1565 = vmatpush2.msra.mxu0 0.0
    %1566 = vmatprep.subr.mxu0 0.0
    %1567 = vmatpush2.msra.mxu0 0.0
    %1568 = vmatprep.subr.mxu0 0.0
    %1569 = vmatpush2.msra.mxu0 0.0
    %1570 = vmatprep.subr.mxu0 0.0
    %1571 = vmatpush2.msra.mxu0 0.0
    %1572 = vmatprep.subr.mxu0 0.0
    %1573 = vmatpush2.msra.mxu0 0.0
    %1574 = vmatprep.subr.mxu0 0.0
    %1575 = vmatpush2.msra.mxu0 0.0
    %1576 = vmatprep.subr.mxu0 0.0
    %1577 = vmatpush2.msra.mxu0 0.0
    %1578 = vmatprep.mubr.f32.mxu0 0.0
    %1579 = vmatmul.mubr.f32.gmra.mxu0 %v1435
    %v1580 = vpop.f32.mrf.mxu0
    %v1581 = vadd.f32 %v507, %v1580
    %v1582 = vpop.f32.mrf.mxu0
    %1583 = vdwg.mxu0
    %v1584 = vmul.f32 %v1513, %v1581
    %1586 = vrot.lane.b32.xlu0 %v1584, 64
    %v1587 = vpop.permute.xlu0 %1586
    %v1589 = vadd.f32 %v400, %v1587
    %v1590 = vtanh.pop %v1589
    %v1591 = vsub.f32 1.0, %v1513
    %1593 = vrot.lane.b32.xlu0 %v1590, 96
    %v1594 = vpop.permute.xlu0 %1593
    %v1596 = vmul.f32 %v1591, %v1594
    %v1597 = vmul.f32 %v1513, %v1431
    %v1598 = vadd.f32 %v1596, %v1597
    %1600 = vrot.lane.b32.xlu0 %v1598, 96
    %v1601 = vpop.permute.xlu0 %1600
    %v1602 = vsel %vm278, %v1601, 0
    %1604 = vmatprep.subr.mxu0 0.0
    %1605 = vmatpush1.msra.mxu0 0.0
    %1606 = vmatprep.subr.mxu0 0.0
    %1607 = vmatpush1.msra.mxu0 0.0
    %1608 = vmatprep.subr.mxu0 0.0
    %1609 = vmatpush1.msra.mxu0 0.0
    %1610 = vmatprep.subr.mxu0 0.0
    %1611 = vmatpush1.msra.mxu0 0.0
    %1612 = vmatprep.subr.mxu0 0.0
    %1613 = vmatpush1.msra.mxu0 0.0
    %1614 = vmatprep.subr.mxu0 0.0
    %1615 = vmatpush1.msra.mxu0 0.0
    %1616 = vmatprep.subr.mxu0 0.0
    %1617 = vmatpush1.msra.mxu0 0.0
    %1618 = vmatprep.subr.mxu0 0.0
    %1619 = vmatpush1.msra.mxu0 0.0
    %1620 = vmatprep.subr.mxu0 0.0
    %1621 = vmatpush1.msra.mxu0 0.0
    %1622 = vmatprep.subr.mxu0 0.0
    %1623 = vmatpush1.msra.mxu0 0.0
    %1624 = vmatprep.subr.mxu0 0.0
    %1625 = vmatpush1.msra.mxu0 0.0
    %1626 = vmatprep.subr.mxu0 0.0
    %1627 = vmatpush1.msra.mxu0 0.0
    %1628 = vmatprep.subr.mxu0 0.0
    %1629 = vmatpush1.msra.mxu0 %v273
    %1630 = vmatprep.subr.mxu0 0.0
    %1631 = vmatpush1.msra.mxu0 %v272
    %1632 = vmatprep.subr.mxu0 0.0
    %1633 = vmatpush1.msra.mxu0 %v271
    %1634 = vmatprep.subr.mxu0 0.0
    %1635 = vmatpush1.msra.mxu0 %v270
    %1636 = vmatprep.subr.mxu0 0.0
    %1637 = vmatpush2.msra.mxu0 0.0
    %1638 = vmatprep.subr.mxu0 0.0
    %1639 = vmatpush2.msra.mxu0 0.0
    %1640 = vmatprep.subr.mxu0 0.0
    %1641 = vmatpush2.msra.mxu0 0.0
    %1642 = vmatprep.subr.mxu0 0.0
    %1643 = vmatpush2.msra.mxu0 0.0
    %1644 = vmatprep.subr.mxu0 0.0
    %1645 = vmatpush2.msra.mxu0 0.0
    %1646 = vmatprep.subr.mxu0 0.0
    %1647 = vmatpush2.msra.mxu0 0.0
    %1648 = vmatprep.subr.mxu0 0.0
    %1649 = vmatpush2.msra.mxu0 0.0
    %1650 = vmatprep.subr.mxu0 0.0
    %1651 = vmatpush2.msra.mxu0 0.0
    %1652 = vmatprep.subr.mxu0 0.0
    %1653 = vmatpush2.msra.mxu0 0.0
    %1654 = vmatprep.subr.mxu0 0.0
    %1655 = vmatpush2.msra.mxu0 0.0
    %1656 = vmatprep.subr.mxu0 0.0
    %1657 = vmatpush2.msra.mxu0 0.0
    %1658 = vmatprep.subr.mxu0 0.0
    %1659 = vmatpush2.msra.mxu0 0.0
    %1660 = vmatprep.subr.mxu0 0.0
    %1661 = vmatpush2.msra.mxu0 0.0
    %1662 = vmatprep.subr.mxu0 0.0
    %1663 = vmatpush2.msra.mxu0 0.0
    %1664 = vmatprep.subr.mxu0 0.0
    %1665 = vmatpush2.msra.mxu0 0.0
    %1666 = vmatprep.subr.mxu0 0.0
    %1667 = vmatpush2.msra.mxu0 0.0
    %1668 = vmatprep.mubr.f32.mxu0 0.0
    %1669 = vmatmul.mubr.f32.gmra.mxu0 %v1602
    %v1670 = vpop.f32.mrf.mxu0
    %v1671 = vadd.f32 0.0, %v1670
    %v1672 = vpop.f32.mrf.mxu0
    %1673 = vdwg.mxu0
    %v1674 = vadd.f32 %v405, %v1671
    %v1675 = vxor.u32 %v1674, 2147483648
    %v1676 = vmul.f32 %v1675, 1.442695
    %v1677 = vpow.pop %v1676
    %v1678 = vadd.f32 %v1677, 1.0
    %v1679 = vrcp.pop %v1678
    %v1680 = vmul.f32 1.0, %v1679
    %1681 = vmatprep.subr.mxu0 0.0
    %1682 = vmatpush1.msra.mxu0 0.0
    %1683 = vmatprep.subr.mxu0 0.0
    %1684 = vmatpush1.msra.mxu0 0.0
    %1685 = vmatprep.subr.mxu0 0.0
    %1686 = vmatpush1.msra.mxu0 0.0
    %1687 = vmatprep.subr.mxu0 0.0
    %1688 = vmatpush1.msra.mxu0 0.0
    %1689 = vmatprep.subr.mxu0 0.0
    %1690 = vmatpush1.msra.mxu0 0.0
    %1691 = vmatprep.subr.mxu0 0.0
    %1692 = vmatpush1.msra.mxu0 0.0
    %1693 = vmatprep.subr.mxu0 0.0
    %1694 = vmatpush1.msra.mxu0 0.0
    %1695 = vmatprep.subr.mxu0 0.0
    %1696 = vmatpush1.msra.mxu0 0.0
    %1697 = vmatprep.subr.mxu0 0.0
    %1698 = vmatpush1.msra.mxu0 0.0
    %1699 = vmatprep.subr.mxu0 0.0
    %1700 = vmatpush1.msra.mxu0 0.0
    %1701 = vmatprep.subr.mxu0 0.0
    %1702 = vmatpush1.msra.mxu0 0.0
    %1703 = vmatprep.subr.mxu0 0.0
    %1704 = vmatpush1.msra.mxu0 0.0
    %1705 = vmatprep.subr.mxu0 0.0
    %1706 = vmatpush1.msra.mxu0 %v500
    %1707 = vmatprep.subr.mxu0 0.0
    %1708 = vmatpush1.msra.mxu0 %v498
    %1709 = vmatprep.subr.mxu0 0.0
    %1710 = vmatpush1.msra.mxu0 %v496
    %1711 = vmatprep.subr.mxu0 0.0
    %1712 = vmatpush1.msra.mxu0 %v494
    %1713 = vmatprep.subr.mxu0 0.0
    %1714 = vmatpush2.msra.mxu0 0.0
    %1715 = vmatprep.subr.mxu0 0.0
    %1716 = vmatpush2.msra.mxu0 0.0
    %1717 = vmatprep.subr.mxu0 0.0
    %1718 = vmatpush2.msra.mxu0 0.0
    %1719 = vmatprep.subr.mxu0 0.0
    %1720 = vmatpush2.msra.mxu0 0.0
    %1721 = vmatprep.subr.mxu0 0.0
    %1722 = vmatpush2.msra.mxu0 0.0
    %1723 = vmatprep.subr.mxu0 0.0
    %1724 = vmatpush2.msra.mxu0 0.0
    %1725 = vmatprep.subr.mxu0 0.0
    %1726 = vmatpush2.msra.mxu0 0.0
    %1727 = vmatprep.subr.mxu0 0.0
    %1728 = vmatpush2.msra.mxu0 0.0
    %1729 = vmatprep.subr.mxu0 0.0
    %1730 = vmatpush2.msra.mxu0 0.0
    %1731 = vmatprep.subr.mxu0 0.0
    %1732 = vmatpush2.msra.mxu0 0.0
    %1733 = vmatprep.subr.mxu0 0.0
    %1734 = vmatpush2.msra.mxu0 0.0
    %1735 = vmatprep.subr.mxu0 0.0
    %1736 = vmatpush2.msra.mxu0 0.0
    %1737 = vmatprep.subr.mxu0 0.0
    %1738 = vmatpush2.msra.mxu0 0.0
    %1739 = vmatprep.subr.mxu0 0.0
    %1740 = vmatpush2.msra.mxu0 0.0
    %1741 = vmatprep.subr.mxu0 0.0
    %1742 = vmatpush2.msra.mxu0 0.0
    %1743 = vmatprep.subr.mxu0 0.0
    %1744 = vmatpush2.msra.mxu0 0.0
    %1745 = vmatprep.mubr.f32.mxu0 0.0
    %1746 = vmatmul.mubr.f32.gmra.mxu0 %v1602
    %v1747 = vpop.f32.mrf.mxu0
    %v1748 = vadd.f32 %v507, %v1747
    %v1749 = vpop.f32.mrf.mxu0
    %1750 = vdwg.mxu0
    %v1751 = vmul.f32 %v1680, %v1748
    %1753 = vrot.lane.b32.xlu0 %v1751, 64
    %v1754 = vpop.permute.xlu0 %1753
    %v1756 = vadd.f32 %v405, %v1754
    %v1757 = vtanh.pop %v1756
    %v1758 = vsub.f32 1.0, %v1680
    %1760 = vrot.lane.b32.xlu0 %v1757, 96
    %v1761 = vpop.permute.xlu0 %1760
    %v1763 = vmul.f32 %v1758, %v1761
    %v1764 = vmul.f32 %v1680, %v1598
    %v1765 = vadd.f32 %v1763, %v1764
    %1767 = vrot.lane.b32.xlu0 %v1765, 96
    %v1768 = vpop.permute.xlu0 %1767
    %1770 = vst.msk [vmem:[#allocation9] sm:$0xff] %vm278, %v1768
    %v1771 = vld [vmem:[%s6] sm:$0xff]
    %v1772 = vld [vmem:[%s6 + $0x8] sm:$0xff]
    %v1773 = vld [vmem:[%s6 + $0x10] sm:$0xff]
    %v1774 = vld [vmem:[%s6 + $0x18] sm:$0xff]
    %v1775 = vlaneseq
    %v1776 = vshrl.u32 %v1775, 7
    %v1777 = vsub.s32 1, %v1776
    %v1778 = vrot.slane %v265, %v1777
    %1779 = vmatprep.subr.mxu0 0.0
    %1780 = vmatpush1.msra.mxu0 0.0
    %1781 = vmatprep.subr.mxu0 0.0
    %1782 = vmatpush1.msra.mxu0 0.0
    %1783 = vmatprep.subr.mxu0 0.0
    %1784 = vmatpush1.msra.mxu0 0.0
    %1785 = vmatprep.subr.mxu0 0.0
    %1786 = vmatpush1.msra.mxu0 0.0
    %1787 = vmatprep.subr.mxu0 0.0
    %1788 = vmatpush1.msra.mxu0 0.0
    %1789 = vmatprep.subr.mxu0 0.0
    %1790 = vmatpush1.msra.mxu0 0.0
    %1791 = vmatprep.subr.mxu0 0.0
    %1792 = vmatpush1.msra.mxu0 0.0
    %1793 = vmatprep.subr.mxu0 0.0
    %1794 = vmatpush1.msra.mxu0 0.0
    %1795 = vmatprep.subr.mxu0 0.0
    %1796 = vmatpush1.msra.mxu0 0.0
    %1797 = vmatprep.subr.mxu0 0.0
    %1798 = vmatpush1.msra.mxu0 0.0
    %1799 = vmatprep.subr.mxu0 0.0
    %1800 = vmatpush1.msra.mxu0 0.0
    %1801 = vmatprep.subr.mxu0 0.0
    %1802 = vmatpush1.msra.mxu0 0.0
    %1803 = vmatprep.subr.mxu0 0.0
    %1804 = vmatpush1.msra.mxu0 %v1774
    %1805 = vmatprep.subr.mxu0 0.0
    %1806 = vmatpush1.msra.mxu0 %v1773
    %1807 = vmatprep.subr.mxu0 0.0
    %1808 = vmatpush1.msra.mxu0 %v1772
    %1809 = vmatprep.subr.mxu0 0.0
    %1810 = vmatpush1.msra.mxu0 %v1771
    %1811 = vmatprep.subr.mxu0 0.0
    %1812 = vmatpush2.msra.mxu0 0.0
    %1813 = vmatprep.subr.mxu0 0.0
    %1814 = vmatpush2.msra.mxu0 0.0
    %1815 = vmatprep.subr.mxu0 0.0
    %1816 = vmatpush2.msra.mxu0 0.0
    %1817 = vmatprep.subr.mxu0 0.0
    %1818 = vmatpush2.msra.mxu0 0.0
    %1819 = vmatprep.subr.mxu0 0.0
    %1820 = vmatpush2.msra.mxu0 0.0
    %1821 = vmatprep.subr.mxu0 0.0
    %1822 = vmatpush2.msra.mxu0 0.0
    %1823 = vmatprep.subr.mxu0 0.0
    %1824 = vmatpush2.msra.mxu0 0.0
    %1825 = vmatprep.subr.mxu0 0.0
    %1826 = vmatpush2.msra.mxu0 0.0
    %1827 = vmatprep.subr.mxu0 0.0
    %1828 = vmatpush2.msra.mxu0 0.0
    %1829 = vmatprep.subr.mxu0 0.0
    %1830 = vmatpush2.msra.mxu0 0.0
    %1831 = vmatprep.subr.mxu0 0.0
    %1832 = vmatpush2.msra.mxu0 0.0
    %1833 = vmatprep.subr.mxu0 0.0
    %1834 = vmatpush2.msra.mxu0 0.0
    %1835 = vmatprep.subr.mxu0 0.0
    %1836 = vmatpush2.msra.mxu0 0.0
    %1837 = vmatprep.subr.mxu0 0.0
    %1838 = vmatpush2.msra.mxu0 0.0
    %1839 = vmatprep.subr.mxu0 0.0
    %1840 = vmatpush2.msra.mxu0 0.0
    %1841 = vmatprep.subr.mxu0 0.0
    %1842 = vmatpush2.msra.mxu0 0.0
    %1843 = vmatprep.mubr.f32.mxu0 0.0
    %1844 = vmatmul.mubr.f32.gmra.mxu0 %v600
    %v1845 = vpop.f32.mrf.mxu0
    %v1846 = vadd.f32 %v1778, %v1845
    %v1847 = vpop.f32.mrf.mxu0
    %1848 = vdwg.mxu0
    %1849 = vmax.xlane.f32.xlu0 %v1846
    %v1850 = vpop.xlane.xlu0 %1849
    %v1851 = vsub.f32 %v1846, %v1850
    %v1852 = vmul.f32 %v1851, 1.442695
    %v1853 = vpow.pop %v1852
    %1854 = vadd.xlane.f32.xlu0 %v1853
    %v1855 = vpop.xlane.xlu0 %1854
    %v1856 = vlog2.pop %v1855
    %v1857 = vmul.f32 %v1856, 0.6931472
    %v1858 = vsub.f32 %v1851, %v1857
    %1859 = vst [vmem:[#allocation8] sm:$0xff] %v1858
    // Predicated region
    $region42: #{decoder_forward.1} parent=1 // pred_check
      _
    $region43: #{decoder_forward.1} parent=1 // pred_check_branch
      %1861 = sbr.rel (0) target = $region45
    $region44: #{decoder_forward.1} parent=1 // pred_region
      %s1863 = ssub.s32 128, 128
      %1864 = vsyncadd [#allocation4], %s1863
      %s1866 = sshll.u32 [#allocation8], 4
      %s1867 = int_to_ptr.vmem [resolvable:$true] %s1866
      %1869 = dma.vmem_to_hbm [thread:$0]  %s1867, 128, %s7, [#allocation4]
    $region45: #{decoder_forward.1} parent=1 // pred_fallthru
      _
    // Predicated region
    $region46: #{decoder_forward.1} parent=1 // pred_check
      _
    $region47: #{decoder_forward.1} parent=1 // pred_check_branch
      %1871 = sbr.rel (0) target = $region49
    $region48: #{decoder_forward.1} parent=1 // pred_region
      %s1873 = ssub.s32 128, 128
      %1874 = vsyncadd [#allocation10], %s1873
      %s1876 = sshll.u32 [#allocation9], 4
      %s1877 = int_to_ptr.vmem [resolvable:$true] %s1876
      %1879 = dma.vmem_to_hbm [thread:$0]  %s1877, 128, %s8, [#allocation10]
    $region49: #{decoder_forward.1} parent=1 // pred_fallthru
      _
    // Predicated region
    $region50: #{decoder_forward.1} parent=1 // pred_check
      _
    $region51: #{decoder_forward.1} parent=1 // pred_check_branch
      %1881 = sbr.rel (0) target = $region53
    $region52: #{decoder_forward.1} parent=1 // pred_region
      %1882 = dma.done [#allocation4], 128
    $region53: #{decoder_forward.1} parent=1 // pred_fallthru
      _
    // Predicated region
    $region54: #{decoder_forward.1} parent=1 // pred_check
      _
    $region55: #{decoder_forward.1} parent=1 // pred_check_branch
      %1884 = sbr.rel (0) target = $region57
    $region56: #{decoder_forward.1} parent=1 // pred_region
      %1885 = dma.done [#allocation10], 128
    $region57: #{decoder_forward.1} parent=1 // pred_fallthru
      _
    %1886 = vsyncpa [#allocation3], 1
    %1887 = vsyncpa [#allocation6], 1
    %1888 = vsyncpa [#allocation4], 1
    %1889 = vsyncpa [#allocation10], 1

</llo_original>
